<compile_context>
chip_gen: v6e
topology: v6e:2x2x1
jax: 0.10.0
libtpu: 0.0.40
codegen_flags: <defaults>
</compile_context>

<pallas_src>
import functools
import numpy as np
import jax
import jax.numpy as jnp
from jax import lax
from jax.experimental import pallas as pl
from jax.experimental.pallas import tpu as pltpu


def _round_up(x, m):
    return (x + m - 1) // m * m


def _vmem_budget():
    """Per-generation VMEM tile budget + scoped limit (v5e/v6e 128 MiB, v7x 64 MiB)."""
    try:
        cap = int(pltpu.get_tpu_info().vmem_capacity_bytes)
    except Exception:
        cap = 64 << 20                      # conservative fallback (v7x per-core VMEM)
    tile_budget = cap // 2                  # ~64 MiB on v5e/v6e, ~32 MiB on v7x
    vmem_limit = int(min(cap * 3 // 4, tile_budget + (32 << 20)))
    return tile_budget, vmem_limit


def _rows_per_tile(rows_total, per_row_bytes, fixed_bytes, budget, n_batch,
                   max_rows=None):
    avail = max(budget - fixed_bytes, per_row_bytes)
    r = max(1, min(rows_total, avail // per_row_bytes))
    if max_rows is not None:
        r = max(1, min(r, int(max_rows)))
    # Keep at least 2 grid steps so the pipeline has depth and both v7x
    # TensorCores get work even for batch-1 inputs.
    if n_batch * pl.cdiv(rows_total, r) < 2 and rows_total > 1:
        r = int(pl.cdiv(rows_total, 2))
    return int(r)


def _conv_block_kernel(*refs, band_rows, rows_out, wo, wf, cout, cpad,
                       use_pool, lrn_size, lrn_alpha, lrn_beta, lrn_k):
    if use_pool:
        p_ref, px_ref, w_ref, b_ref, o_ref = refs
    else:
        p_ref, w_ref, b_ref, o_ref = refs

    # ---- assemble the patch band for this tile (pool path appends 1 halo row) ----
    p = p_ref[0]                                         # (rows_main, Wo, Kdim)
    if use_pool:
        p = jnp.concatenate([p, px_ref[0]], axis=0)      # (band_rows, Wo, Kdim)
    kdim = p.shape[-1]
    p = p.reshape(band_rows * wo, kdim)

    # ---- Conv2d: one MXU matmul; Mosaic pads the K=Kdim contraction in VMEM ----
    conv = jnp.dot(p, w_ref[...], preferred_element_type=jnp.float32)
    conv = conv + b_ref[...]                             # (M, cpad), f32

    # ---- ReLU ----
    act = jnp.maximum(conv, 0.0)

    # ---- LocalResponseNorm over channels (channels on the 128 lanes) ----
    # Window sum via XLU rolls; wrap-around only touches the zero-padded channel
    # lanes (cpad - cout >= lrn_size // 2), matching PyTorch's zero boundary.
    sq = act * act
    lo = -(lrn_size // 2)
    hi = lrn_size - 1 - lrn_size // 2
    win = sq
    for d in range(lo, hi + 1):
        if d == 0:
            continue
        win = win + pltpu.roll(sq, shift=(-d) % cpad, axis=1)
    base = lrn_k + (lrn_alpha / lrn_size) * win
    if abs(lrn_beta - 0.75) < 1e-12:
        inv = lax.rsqrt(base * jnp.sqrt(base))           # base**-0.75, 2 EUP ops
    else:
        inv = jnp.exp(jnp.float32(-lrn_beta) * jnp.log(base))
    y3 = (act * inv).reshape(band_rows, wo, cpad)

    # ---- MaxPool2d(3, 2) / Identity, then fold (cols, Cout) onto the lanes ----
    if use_pool:
        r = rows_out
        # band_rows = 2r + 1 contiguous conv rows: rows 2f / 2f+1 come from a
        # leading-dim reshape, rows 2f+2 from the evens shifted by one plus the halo.
        y_eo = y3[0:2 * r].reshape(r, 2, wo, cpad)
        r0 = y_eo[:, 0:1].reshape(r, wo, cpad)           # conv rows 2f
        r1 = y_eo[:, 1:2].reshape(r, wo, cpad)           # conv rows 2f+1
        if r > 1:
            r2 = jnp.concatenate([r0[1:], y3[2 * r:2 * r + 1]], axis=0)
        else:
            r2 = y3[2 * r:2 * r + 1]                     # conv rows 2f+2
        rmax = jnp.maximum(jnp.maximum(r0, r1), r2)      # (r, Wo, cpad)
        pieces = []
        for j in range(wf):                              # cols 2j, 2j+1, 2j+2
            c = jnp.maximum(jnp.maximum(rmax[:, 2 * j:2 * j + 1],
                                        rmax[:, 2 * j + 1:2 * j + 2]),
                            rmax[:, 2 * j + 2:2 * j + 3])
            pieces.append(c[..., :cout])                 # (r, 1, Cout)
    else:
        pieces = [y3[:, j:j + 1, :cout] for j in range(wo)]

    out = jnp.concatenate(pieces, axis=-1)               # (rows_out, 1, Wf*Cout)
    o_ref[0] = out.astype(o_ref.dtype)


def conv_block(x_nchw, w_oihw, bias, *, stride, padding, use_pool,
               lrn_size=5, lrn_alpha=1e-4, lrn_beta=0.75, lrn_k=2.0,
               operand_dtype=jnp.float32, max_rows_per_tile=None):
    N, Cin, H, W = x_nchw.shape
    Cout, Cin_w, KH, KW = w_oihw.shape
    assert Cin == Cin_w
    stride = int(stride)
    padding = int(padding)
    Ho = (H + 2 * padding - KH) // stride + 1
    Wo = (W + 2 * padding - KW) // stride + 1
    if use_pool:
        Hf, Wf = (Ho - 3) // 2 + 1, (Wo - 3) // 2 + 1
    else:
        Hf, Wf = Ho, Wo

    halo = lrn_size // 2
    Cpad = max(128, _round_up(Cout + halo, 128))   # in-VMEM lanes only (never in HBM)
    Kdim = KH * KW * Cin
    op_dtype = jnp.dtype(operand_dtype)
    op_bytes = op_dtype.itemsize

    # ---- plain-JAX layout plumbing: NCHW -> NHWC, spatial pad, im2col patches ----
    # Patches stay at Kdim on the last dim (no contraction padding in HBM).
    # TODO(synk): build patches in-kernel from a raw halo row band to remove the
    # KH*KW im2col replication from HBM entirely.
    x_nhwc = jnp.transpose(x_nchw, (0, 2, 3, 1)).astype(op_dtype)
    x_sp = jnp.pad(x_nhwc, ((0, 0), (padding, padding), (padding, padding), (0, 0)))
    cols = []
    for kh in range(KH):
        for kw in range(KW):
            cols.append(lax.slice(
                x_sp, (0, kh, kw, 0),
                (N, kh + (Ho - 1) * stride + 1, kw + (Wo - 1) * stride + 1, Cin),
                (1, stride, stride, 1)))
    patches = jnp.concatenate(cols, axis=-1)              # (N, Ho, Wo, Kdim)

    # ---- row-tile sizing: per-generation VMEM budget incl. f32 temporaries ----
    budget, vmem_limit = _vmem_budget()
    fixed = Kdim * Cpad * op_bytes + Cpad * 4 + (1 << 20)
    if use_pool:
        per_row = (2 * Wo * Kdim * op_bytes * 3        # patch band rows (buffered)
                   + 6 * 2 * Wo * Cpad * 4             # in-kernel f32 temporaries
                   + Wf * Cout * 4 * 2)                # double-buffered output block
        fixed += Wo * Kdim * op_bytes * 3 + 6 * Wo * Cpad * 4    # the +1 halo row
        R = _rows_per_tile(Hf, per_row, fixed, budget, N, max_rows_per_tile)
        T = int(pl.cdiv(Hf, R))
        rows_main = 2 * R
        band_rows = 2 * R + 1
        Ho_need = 2 * R * T + 1
    else:
        per_row = Wo * Kdim * op_bytes * 3 + 6 * Wo * Cpad * 4 + Wo * Cout * 4 * 2
        R = _rows_per_tile(Ho, per_row, fixed, budget, N, max_rows_per_tile)
        T = int(pl.cdiv(Ho, R))
        rows_main = R
        band_rows = R
        Ho_need = R * T
    if Ho_need > Ho:                                   # pad rows for the last tile
        patches = jnp.pad(patches, ((0, 0), (0, Ho_need - Ho), (0, 0), (0, 0)))

    # Weight (Kdim, Cpad) / bias (1, Cpad): channel pad only (tiny constants, lets
    # the LRN lane-rolls wrap into zero channels).
    w_mat = jnp.transpose(w_oihw, (2, 3, 1, 0)).reshape(Kdim, Cout).astype(op_dtype)
    w_mat = jnp.pad(w_mat, ((0, 0), (0, Cpad - Cout)))
    b_mat = jnp.pad(bias.astype(jnp.float32).reshape(1, Cout),
                    ((0, 0), (0, Cpad - Cout)))

    WC = Wf * Cout
    kernel = functools.partial(
        _conv_block_kernel, band_rows=band_rows, rows_out=R, wo=Wo, wf=Wf,
        cout=Cout, cpad=Cpad, use_pool=bool(use_pool), lrn_size=int(lrn_size),
        lrn_alpha=float(lrn_alpha), lrn_beta=float(lrn_beta), lrn_k=float(lrn_k))

    in_specs = [pl.BlockSpec((1, rows_main, Wo, Kdim), lambda n, t: (n, t, 0, 0))]
    inputs = [patches]
    if use_pool:
        # One-row halo (window-3/stride-2 overlap) as its own 1-row block instead
        # of duplicating the patch tensor in HBM.
        in_specs.append(pl.BlockSpec(
            (1, 1, Wo, Kdim), lambda n, t, _R=R: (n, 2 * _R * (t + 1), 0, 0)))
        inputs.append(patches)
    in_specs += [pl.BlockSpec((Kdim, Cpad), lambda n, t: (0, 0)),
                 pl.BlockSpec((1, Cpad), lambda n, t: (0, 0))]
    inputs += [w_mat, b_mat]

    out = pl.pallas_call(
        kernel,
        out_shape=jax.ShapeDtypeStruct((N, T * R, 1, WC), x_nchw.dtype),
        grid_spec=pltpu.PrefetchScalarGridSpec(
            num_scalar_prefetch=0,
            grid=(N, T),
            in_specs=in_specs,
            out_specs=pl.BlockSpec((1, R, 1, WC), lambda n, t: (n, t, 0, 0))),
        compiler_params=pltpu.CompilerParams(
            dimension_semantics=("parallel", "parallel"),
            vmem_limit_bytes=vmem_limit),
    )(*inputs)

    out = out[:, :Hf].reshape(N, Hf, Wf, Cout)        # drop row-tile padding
    return jnp.transpose(out, (0, 3, 1, 2))           # NHWC -> NCHW


def conv_block_reference(x, w, b, *, stride, padding, use_pool,
                         lrn_size=5, lrn_alpha=1e-4, lrn_beta=0.75, lrn_k=2.0):
    """Pure-JAX reference replicating PyTorch ConvBlock semantics (NCHW)."""
    y = lax.conv_general_dilated(
        x, w, window_strides=(stride, stride),
        padding=[(padding, padding), (padding, padding)],
        dimension_numbers=("NCHW", "OIHW", "NCHW"))
    y = y + b.reshape(1, -1, 1, 1)
    y = jnp.maximum(y, 0.0)
    C = y.shape[1]
    sq = y * y
    sq_pad = jnp.pad(sq, ((0, 0), (lrn_size // 2, lrn_size - 1 - lrn_size // 2),
                          (0, 0), (0, 0)))
    win = sum(sq_pad[:, d:d + C] for d in range(lrn_size))
    denom = (lrn_k + lrn_alpha / lrn_size * win) ** lrn_beta
    y = y / denom
    if use_pool:
        y = lax.reduce_window(y, jnp.array(-jnp.inf, y.dtype), lax.max,
                              (1, 1, 3, 3), (1, 1, 2, 2), "VALID")
    return y


if __name__ == "__main__":
    key = jax.random.PRNGKey(0)
    kx, kw, kb = jax.random.split(key, 3)
    # ConvBlock(in_channels=4, out_channels=16, kernel_size=3, stride=1, padding=1, use_pool=...)
    N, Cin, H, W = 2, 4, 16, 16
    Cout, K, stride, padding = 16, 3, 1, 1
    x = jax.random.normal(kx, (N, Cin, H, W), jnp.float32)
    w = jax.random.normal(kw, (Cout, Cin, K, K), jnp.float32) * 0.1
    b = jax.random.normal(kb, (Cout,), jnp.float32) * 0.1

    # f32 operands: strict tolerance; exercise MaxPool2d and Identity branches,
    # both single-tile and multi-row-tile paths (last-tile row padding).
    for use_pool in (True, False):
        for max_rows in (None, 2):
            out = conv_block(x, w, b, stride=stride, padding=padding,
                             use_pool=use_pool, max_rows_per_tile=max_rows)
            out = jax.block_until_ready(out)
            ref = conv_block_reference(x, w, b, stride=stride, padding=padding,
                                       use_pool=use_pool)
            assert out.shape == ref.shape, (out.shape, ref.shape)
            np.testing.assert_allclose(np.asarray(out), np.asarray(ref),
                                       rtol=1e-3, atol=1e-4)

    # bf16 matmul operands (halves the dominant HBM read stream); bf16 input
    # rounding costs ~1e-3 absolute, so validate against a looser budget.
    out = conv_block(x, w, b, stride=stride, padding=padding, use_pool=True,
                     operand_dtype=jnp.bfloat16)
    out = jax.block_until_ready(out)
    ref = conv_block_reference(x, w, b, stride=stride, padding=padding,
                               use_pool=True)
    np.testing.assert_allclose(np.asarray(out), np.asarray(ref),
                               rtol=1e-2, atol=1e-2)

    print("KERNEL_OK")
</pallas_src>

<mosaic_0001>
module attributes {stable_mosaic.version = 11 : i64} {
  func.func @_conv_block_kernel(%arg0: i32, %arg1: i32, %arg2: memref<1x14x16x36xf32, #tpu.memory_space<vmem>>, %arg3: memref<1x1x16x36xf32, #tpu.memory_space<vmem>>, %arg4: memref<36x128xf32, #tpu.memory_space<vmem>>, %arg5: memref<1x128xf32, #tpu.memory_space<vmem>>, %arg6: memref<1x7x1x112xf32, #tpu.memory_space<vmem>>) attributes {dimension_semantics = [#tpu.dimension_semantics<parallel>, #tpu.dimension_semantics<parallel>], iteration_bounds = array<i64: 2, 1>, scalar_prefetch = 0 : i64, scratch_operands = 0 : i64, tpu.core_type = #tpu.core_type<tc>, window_params = [{transform_indices = @transform_0, window_bounds = array<i64: 1, 14, 16, 36>}, {transform_indices = @transform_1, window_bounds = array<i64: 1, 1, 16, 36>}, {pipeline_mode = #tpu.pipeline_mode<synchronous>, transform_indices = @transform_2, window_bounds = array<i64: 36, 128>}, {pipeline_mode = #tpu.pipeline_mode<synchronous>, transform_indices = @transform_3, window_bounds = array<i64: 1, 128>}, {transform_indices = @transform_4, window_bounds = array<i64: 1, 7, 1, 112>}]} {
    %c0 = arith.constant 0 : index
    %c0_0 = arith.constant 0 : index
    %c0_1 = arith.constant 0 : index
    %c0_2 = arith.constant 0 : index
    %0 = vector.load %arg2[%c0, %c0_0, %c0_1, %c0_2] : memref<1x14x16x36xf32, #tpu.memory_space<vmem>>, vector<1x14x16x36xf32>
    %1 = vector.shape_cast %0 : vector<1x14x16x36xf32> to vector<14x16x36xf32>
    %c0_3 = arith.constant 0 : index
    %c0_4 = arith.constant 0 : index
    %c0_5 = arith.constant 0 : index
    %c0_6 = arith.constant 0 : index
    %2 = vector.load %arg3[%c0_3, %c0_4, %c0_5, %c0_6] : memref<1x1x16x36xf32, #tpu.memory_space<vmem>>, vector<1x1x16x36xf32>
    %3 = vector.shape_cast %2 : vector<1x1x16x36xf32> to vector<1x16x36xf32>
    %4 = tpu.concatenate %1, %3 in 0 : vector<14x16x36xf32>, vector<1x16x36xf32> -> vector<15x16x36xf32>
    %5 = vector.shape_cast %4 : vector<15x16x36xf32> to vector<240x36xf32>
    %c0_7 = arith.constant 0 : index
    %c0_8 = arith.constant 0 : index
    %6 = vector.load %arg4[%c0_7, %c0_8] : memref<36x128xf32, #tpu.memory_space<vmem>>, vector<36x128xf32>
    %cst = arith.constant dense<0.000000e+00> : vector<240x128xf32>
    %7 = tpu.matmul %5, %6, %cst {dimension_numbers = #tpu.dot_dimension_numbers<[1], [0], [0], [1], [0, 0, 1, 1], [], []>} : vector<240x36xf32>, vector<36x128xf32>, vector<240x128xf32> -> vector<240x128xf32>
    %c0_9 = arith.constant 0 : index
    %c0_10 = arith.constant 0 : index
    %8 = vector.load %arg5[%c0_9, %c0_10] : memref<1x128xf32, #tpu.memory_space<vmem>>, vector<1x128xf32>
    %9 = vector.broadcast %8 : vector<1x128xf32> to vector<240x128xf32>
    %10 = arith.addf %7, %9 : vector<240x128xf32>
    %cst_11 = arith.constant 0.000000e+00 : f32
    %11 = vector.broadcast %cst_11 : f32 to vector<240x128xf32>
    %12 = arith.maximumf %10, %11 : vector<240x128xf32>
    %13 = arith.mulf %12, %12 : vector<240x128xf32>
    %c2_i32 = arith.constant 2 : i32
    %14 = tpu.dynamic_rotate %13 by %c2_i32 dim 1 : vector<240x128xf32>, i32 -> vector<240x128xf32>
    %15 = arith.addf %13, %14 : vector<240x128xf32>
    %c1_i32 = arith.constant 1 : i32
    %16 = tpu.dynamic_rotate %13 by %c1_i32 dim 1 : vector<240x128xf32>, i32 -> vector<240x128xf32>
    %17 = arith.addf %15, %16 : vector<240x128xf32>
    %c127_i32 = arith.constant 127 : i32
    %18 = tpu.dynamic_rotate %13 by %c127_i32 dim 1 : vector<240x128xf32>, i32 -> vector<240x128xf32>
    %19 = arith.addf %17, %18 : vector<240x128xf32>
    %c126_i32 = arith.constant 126 : i32
    %20 = tpu.dynamic_rotate %13 by %c126_i32 dim 1 : vector<240x128xf32>, i32 -> vector<240x128xf32>
    %21 = arith.addf %19, %20 : vector<240x128xf32>
    %cst_12 = arith.constant 2.000000e-05 : f32
    %22 = vector.broadcast %cst_12 : f32 to vector<240x128xf32>
    %23 = arith.mulf %22, %21 : vector<240x128xf32>
    %cst_13 = arith.constant 2.000000e+00 : f32
    %24 = vector.broadcast %cst_13 : f32 to vector<240x128xf32>
    %25 = arith.addf %24, %23 : vector<240x128xf32>
    %26 = math.sqrt %25 : vector<240x128xf32>
    %27 = arith.mulf %25, %26 : vector<240x128xf32>
    %28 = math.rsqrt %27 : vector<240x128xf32>
    %29 = arith.mulf %12, %28 : vector<240x128xf32>
    %30 = vector.shape_cast %29 : vector<240x128xf32> to vector<15x16x128xf32>
    %31 = vector.extract_strided_slice %30 {offsets = [0, 0, 0], sizes = [14, 16, 128], strides = [1, 1, 1]} : vector<15x16x128xf32> to vector<14x16x128xf32>
    %32 = vector.shape_cast %31 : vector<14x16x128xf32> to vector<7x2x16x128xf32>
    %33 = vector.extract_strided_slice %32 {offsets = [0, 0, 0, 0], sizes = [7, 1, 16, 128], strides = [1, 1, 1, 1]} : vector<7x2x16x128xf32> to vector<7x1x16x128xf32>
    %34 = vector.shape_cast %33 : vector<7x1x16x128xf32> to vector<7x16x128xf32>
    %35 = vector.extract_strided_slice %32 {offsets = [0, 1, 0, 0], sizes = [7, 1, 16, 128], strides = [1, 1, 1, 1]} : vector<7x2x16x128xf32> to vector<7x1x16x128xf32>
    %36 = vector.shape_cast %35 : vector<7x1x16x128xf32> to vector<7x16x128xf32>
    %37 = vector.extract_strided_slice %34 {offsets = [1, 0, 0], sizes = [6, 16, 128], strides = [1, 1, 1]} : vector<7x16x128xf32> to vector<6x16x128xf32>
    %38 = vector.extract_strided_slice %30 {offsets = [14, 0, 0], sizes = [1, 16, 128], strides = [1, 1, 1]} : vector<15x16x128xf32> to vector<1x16x128xf32>
    %39 = tpu.concatenate %37, %38 in 0 : vector<6x16x128xf32>, vector<1x16x128xf32> -> vector<7x16x128xf32>
    %40 = arith.maximumf %34, %36 : vector<7x16x128xf32>
    %41 = arith.maximumf %40, %39 : vector<7x16x128xf32>
    %42 = vector.extract_strided_slice %41 {offsets = [0, 0, 0], sizes = [7, 1, 128], strides = [1, 1, 1]} : vector<7x16x128xf32> to vector<7x1x128xf32>
    %43 = vector.extract_strided_slice %41 {offsets = [0, 1, 0], sizes = [7, 1, 128], strides = [1, 1, 1]} : vector<7x16x128xf32> to vector<7x1x128xf32>
    %44 = arith.maximumf %42, %43 : vector<7x1x128xf32>
    %45 = vector.extract_strided_slice %41 {offsets = [0, 2, 0], sizes = [7, 1, 128], strides = [1, 1, 1]} : vector<7x16x128xf32> to vector<7x1x128xf32>
    %46 = arith.maximumf %44, %45 : vector<7x1x128xf32>
    %47 = vector.extract_strided_slice %46 {offsets = [0, 0, 0], sizes = [7, 1, 16], strides = [1, 1, 1]} : vector<7x1x128xf32> to vector<7x1x16xf32>
    %48 = vector.extract_strided_slice %41 {offsets = [0, 2, 0], sizes = [7, 1, 128], strides = [1, 1, 1]} : vector<7x16x128xf32> to vector<7x1x128xf32>
    %49 = vector.extract_strided_slice %41 {offsets = [0, 3, 0], sizes = [7, 1, 128], strides = [1, 1, 1]} : vector<7x16x128xf32> to vector<7x1x128xf32>
    %50 = arith.maximumf %48, %49 : vector<7x1x128xf32>
    %51 = vector.extract_strided_slice %41 {offsets = [0, 4, 0], sizes = [7, 1, 128], strides = [1, 1, 1]} : vector<7x16x128xf32> to vector<7x1x128xf32>
    %52 = arith.maximumf %50, %51 : vector<7x1x128xf32>
    %53 = vector.extract_strided_slice %52 {offsets = [0, 0, 0], sizes = [7, 1, 16], strides = [1, 1, 1]} : vector<7x1x128xf32> to vector<7x1x16xf32>
    %54 = vector.extract_strided_slice %41 {offsets = [0, 4, 0], sizes = [7, 1, 128], strides = [1, 1, 1]} : vector<7x16x128xf32> to vector<7x1x128xf32>
    %55 = vector.extract_strided_slice %41 {offsets = [0, 5, 0], sizes = [7, 1, 128], strides = [1, 1, 1]} : vector<7x16x128xf32> to vector<7x1x128xf32>
    %56 = arith.maximumf %54, %55 : vector<7x1x128xf32>
    %57 = vector.extract_strided_slice %41 {offsets = [0, 6, 0], sizes = [7, 1, 128], strides = [1, 1, 1]} : vector<7x16x128xf32> to vector<7x1x128xf32>
    %58 = arith.maximumf %56, %57 : vector<7x1x128xf32>
    %59 = vector.extract_strided_slice %58 {offsets = [0, 0, 0], sizes = [7, 1, 16], strides = [1, 1, 1]} : vector<7x1x128xf32> to vector<7x1x16xf32>
    %60 = vector.extract_strided_slice %41 {offsets = [0, 6, 0], sizes = [7, 1, 128], strides = [1, 1, 1]} : vector<7x16x128xf32> to vector<7x1x128xf32>
    %61 = vector.extract_strided_slice %41 {offsets = [0, 7, 0], sizes = [7, 1, 128], strides = [1, 1, 1]} : vector<7x16x128xf32> to vector<7x1x128xf32>
    %62 = arith.maximumf %60, %61 : vector<7x1x128xf32>
    %63 = vector.extract_strided_slice %41 {offsets = [0, 8, 0], sizes = [7, 1, 128], strides = [1, 1, 1]} : vector<7x16x128xf32> to vector<7x1x128xf32>
    %64 = arith.maximumf %62, %63 : vector<7x1x128xf32>
    %65 = vector.extract_strided_slice %64 {offsets = [0, 0, 0], sizes = [7, 1, 16], strides = [1, 1, 1]} : vector<7x1x128xf32> to vector<7x1x16xf32>
    %66 = vector.extract_strided_slice %41 {offsets = [0, 8, 0], sizes = [7, 1, 128], strides = [1, 1, 1]} : vector<7x16x128xf32> to vector<7x1x128xf32>
    %67 = vector.extract_strided_slice %41 {offsets = [0, 9, 0], sizes = [7, 1, 128], strides = [1, 1, 1]} : vector<7x16x128xf32> to vector<7x1x128xf32>
    %68 = arith.maximumf %66, %67 : vector<7x1x128xf32>
    %69 = vector.extract_strided_slice %41 {offsets = [0, 10, 0], sizes = [7, 1, 128], strides = [1, 1, 1]} : vector<7x16x128xf32> to vector<7x1x128xf32>
    %70 = arith.maximumf %68, %69 : vector<7x1x128xf32>
    %71 = vector.extract_strided_slice %70 {offsets = [0, 0, 0], sizes = [7, 1, 16], strides = [1, 1, 1]} : vector<7x1x128xf32> to vector<7x1x16xf32>
    %72 = vector.extract_strided_slice %41 {offsets = [0, 10, 0], sizes = [7, 1, 128], strides = [1, 1, 1]} : vector<7x16x128xf32> to vector<7x1x128xf32>
    %73 = vector.extract_strided_slice %41 {offsets = [0, 11, 0], sizes = [7, 1, 128], strides = [1, 1, 1]} : vector<7x16x128xf32> to vector<7x1x128xf32>
    %74 = arith.maximumf %72, %73 : vector<7x1x128xf32>
    %75 = vector.extract_strided_slice %41 {offsets = [0, 12, 0], sizes = [7, 1, 128], strides = [1, 1, 1]} : vector<7x16x128xf32> to vector<7x1x128xf32>
    %76 = arith.maximumf %74, %75 : vector<7x1x128xf32>
    %77 = vector.extract_strided_slice %76 {offsets = [0, 0, 0], sizes = [7, 1, 16], strides = [1, 1, 1]} : vector<7x1x128xf32> to vector<7x1x16xf32>
    %78 = vector.extract_strided_slice %41 {offsets = [0, 12, 0], sizes = [7, 1, 128], strides = [1, 1, 1]} : vector<7x16x128xf32> to vector<7x1x128xf32>
    %79 = vector.extract_strided_slice %41 {offsets = [0, 13, 0], sizes = [7, 1, 128], strides = [1, 1, 1]} : vector<7x16x128xf32> to vector<7x1x128xf32>
    %80 = arith.maximumf %78, %79 : vector<7x1x128xf32>
    %81 = vector.extract_strided_slice %41 {offsets = [0, 14, 0], sizes = [7, 1, 128], strides = [1, 1, 1]} : vector<7x16x128xf32> to vector<7x1x128xf32>
    %82 = arith.maximumf %80, %81 : vector<7x1x128xf32>
    %83 = vector.extract_strided_slice %82 {offsets = [0, 0, 0], sizes = [7, 1, 16], strides = [1, 1, 1]} : vector<7x1x128xf32> to vector<7x1x16xf32>
    %84 = tpu.concatenate %47, %53, %59, %65, %71, %77, %83 in 2 : vector<7x1x16xf32>, vector<7x1x16xf32>, vector<7x1x16xf32>, vector<7x1x16xf32>, vector<7x1x16xf32>, vector<7x1x16xf32>, vector<7x1x16xf32> -> vector<7x1x112xf32>
    %c0_14 = arith.constant 0 : index
    %c0_15 = arith.constant 0 : index
    %c0_16 = arith.constant 0 : index
    %c0_17 = arith.constant 0 : index
    %85 = vector.load %arg6[%c0_14, %c0_15, %c0_16, %c0_17] : memref<1x7x1x112xf32, #tpu.memory_space<vmem>>, vector<1x7x1x112xf32>
    %86 = vector.shape_cast %85 : vector<1x7x1x112xf32> to vector<7x1x112xf32>
    %87 = vector.shape_cast %84 : vector<7x1x112xf32> to vector<1x7x1x112xf32>
    tpu.vector_store %arg6[%c0_14, %c0_15, %c0_16, %c0_17], %87 {strides = array<i32>} : memref<1x7x1x112xf32, #tpu.memory_space<vmem>>, vector<1x7x1x112xf32>,
    return
  }
  func.func @transform_0(%arg0: i32, %arg1: i32) -> (i32, i32, i32, i32) {
    %c0_i32 = arith.constant 0 : i32
    %c0_i32_0 = arith.constant 0 : i32
    %c0_i32_1 = arith.constant 0 : i32
    return %arg0, %arg1, %c0_i32, %c0_i32_0 : i32, i32, i32, i32
  }
  func.func @transform_1(%arg0: i32, %arg1: i32) -> (i32, i32, i32, i32) {
    %c1_i32 = arith.constant 1 : i32
    %0 = arith.addi %arg1, %c1_i32 : i32
    %c14_i32 = arith.constant 14 : i32
    %1 = arith.muli %c14_i32, %0 : i32
    %c0_i32 = arith.constant 0 : i32
    %c0_i32_0 = arith.constant 0 : i32
    %c0_i32_1 = arith.constant 0 : i32
    return %arg0, %1, %c0_i32, %c0_i32_0 : i32, i32, i32, i32
  }
  func.func @transform_2(%arg0: i32, %arg1: i32) -> (i32, i32) {
    %c0_i32 = arith.constant 0 : i32
    %c0_i32_0 = arith.constant 0 : i32
    %c0_i32_1 = arith.constant 0 : i32
    return %c0_i32, %c0_i32_0 : i32, i32
  }
  func.func @transform_3(%arg0: i32, %arg1: i32) -> (i32, i32) {
    %c0_i32 = arith.constant 0 : i32
    %c0_i32_0 = arith.constant 0 : i32
    %c0_i32_1 = arith.constant 0 : i32
    return %c0_i32, %c0_i32_0 : i32, i32
  }
  func.func @transform_4(%arg0: i32, %arg1: i32) -> (i32, i32, i32, i32) {
    %c0_i32 = arith.constant 0 : i32
    %c0_i32_0 = arith.constant 0 : i32
    %c0_i32_1 = arith.constant 0 : i32
    return %arg0, %arg1, %c0_i32, %c0_i32_0 : i32, i32, i32, i32
  }
}

</mosaic_0001>

<llo_original>
// kernel: tpu_custom_call.1
$region0: #{tpu_custom_call.1}
  #allocation0 [shape = 'u32[]', space=smem, size = 0x4, offset = 0x4, fixed_abs, tag = 'smem constant byte address 0x4 - core index']
  #allocation1 [shape = 'u32[144,128]{1,0:T(1,128)}', space=vmem, size = 0x12000, scoped, tag = 'internal scratch']
  %s0 = inlined_call_operand.hbm [shape: f32[2,16,16,36], index: 0, kind: input, shape index: {}]
  %s1 = inlined_call_operand.hbm [shape: f32[2,16,16,36], index: 1, kind: input, shape index: {}]
  %s2 = inlined_call_operand.hbm [shape: f32[36,128], index: 2, kind: input, shape index: {}]
  %s3 = inlined_call_operand.vmem [shape: f32[1,128], index: 3, kind: input, shape index: {}]
  %s4 = inlined_call_operand.hbm [shape: f32[2,7,1,112], index: 4, kind: output, shape index: {}]
  %s5 = sld [smem:[#allocation0]]
  $region61: #{tpu_custom_call.1} parent=0
    _
  %s7 = ssub.s32 1, %s5
  %s8 = scalar_select 0, %s7, %s5
  $region1: #{tpu_custom_call.1} parent=0
    #allocation2 [shape = 'u8[229376]{0}', space=vmem, size = 0x38000, scoped, tag = 'input window, operand 0']
    #allocation3 [shape = 's32[2]{0}', space=sflag, size = 0x8, scoped, tag = 'scoped memory for tpu_custom_call.1']
    #allocation4 [shape = 's32[2]{0}', space=sflag, size = 0x8, scoped, tag = 'scoped memory for tpu_custom_call.1']
    #allocation5 [shape = 'u8[16384]{0}', space=vmem, size = 0x4000, scoped, tag = 'input window, operand 1']
    #allocation6 [shape = 's32[2]{0}', space=sflag, size = 0x8, scoped, tag = 'scoped memory for tpu_custom_call.1']
    #allocation7 [shape = 'u8[20480]{0}', space=vmem, size = 0x5000, scoped, tag = 'input window, operand 2, single buffered']
    #allocation8 [shape = 'u8[7168]{0}', space=vmem, size = 0x1c00, scoped, tag = 'output window, operand 0']
    %9 = vsyncpa [#allocation3], 0
    %s10 = scalar_lea.sflag [#allocation3], 1
    %11 = vsyncpa %s10, 0
    %12 = vsyncpa [#allocation6], 0
    %s13 = scalar_lea.sflag [#allocation6], 1
    %14 = vsyncpa %s13, 0
    %15 = vsyncpa [#allocation4], 0
    %s16 = scalar_lea.sflag [#allocation4], 1
    %17 = vsyncpa %s16, 0
    loop: start=0, step=1, limit=4
    $region2: #{tpu_custom_call.1} parent=1 // loop_pre_header
      _
    $region3: #{tpu_custom_call.1} parent=1 // loop_header
      %s19 = sphi 0, %s23
      %p20 = scmp.ge.s32.totalorder %s19, 4
      %s26 = sphi 0, %s38
      %s27 = sphi 0, %s34
      %s28 = sphi 0, %s26
      %s29 = sphi 0, %s27
      %s30 = sphi 0, %s28
      %s31 = sphi 0, %s29
      %s43 = sphi 0, %s45
      %s46 = sphi 0, %s43
      %s47 = sphi 0, %s46
      %s63 = sphi 0, %s47
      %s75 = sphi 0, %s77
      %s78 = sphi 0, %s75
      %s79 = sphi 0, %s78
      %s95 = sphi 0, %s79
      %s99 = sphi 0, %s99
      %s101 = sphi 0, %s99
      %s102 = sphi 0, %s101
      %s116 = sphi 0, %s102
      %s120 = sphi 0, %s120
      %s122 = sphi 0, %s120
      %s123 = sphi 0, %s122
      %s137 = sphi 0, %s123
      %s145 = sphi 0, %s147
      %s148 = sphi 0, %s145
      %s149 = sphi 0, %s148
      %s165 = sphi 0, %s149
    $region4: #{tpu_custom_call.1} parent=1 // loop_header_branch
      %22 = sbr.rel (%p20) target = $region8
    $region5: #{tpu_custom_call.1} parent=1 // loop_body
      %s24 = ssub.s32 %s19, 1
      %s25 = ssub.s32 %s19, 2
      %s32 = sadd.s32 1, %s27
      %p33 = scmp.ge.s32.totalorder %s32, 1
      %s34 = scalar_select %p33, 0, %s32
      %s35 = sadd.s32 1, %s26
      %s36 = scalar_select %p33, %s35, %s26
      %p37 = scmp.ge.s32.totalorder %s36, 2
      %s38 = scalar_select %p37, 0, %s36
      %s39 = ssub.s32 %s26, %s38
      %s40 = ssub.s32 %s27, %s34
      %s41 = sor.u32 %s39, %s40
      %p42 = scmp.eq.s32.totalorder %s41, 0
      %s44 = sadd.s32 %s43, 1
      %s45 = scalar_select %p42, %s43, %s44
      %p48 = pneg %p42
      %p49 = scmp.eq.s32.totalorder %s19, 1
      %p50 = por %p48, %p49
      %p51 = scmp.ne.s32.totalorder %s43, %s46
      %p52 = scmp.eq.s32.totalorder %s19, 0
      %p53 = por %p51, %p52
      %p54 = scmp.ne.s32.totalorder %s43, %s46
      %p55 = scmp.eq.s32.totalorder %s24, 1
      %p56 = por %p54, %p55
      %p57 = scmp.ne.s32.totalorder %s46, %s47
      %p58 = scmp.eq.s32.totalorder %s24, 0
      %p59 = por %p57, %p58
      %p60 = scmp.ne.s32.totalorder %s46, %s47
      %p61 = scmp.eq.s32.totalorder %s25, 1
      %p62 = por %p60, %p61
      %p64 = scmp.ne.s32.totalorder %s47, %s63
      %p65 = scmp.eq.s32.totalorder %s25, 0
      %p66 = por %p64, %p65
      %s67 = sadd.s32 %s27, 1
      %s68 = smul.u32 %s67, 14
      %s69 = sadd.s32 %s34, 1
      %s70 = smul.u32 %s69, 14
      %s71 = ssub.s32 %s26, %s38
      %s72 = ssub.s32 %s68, %s70
      %s73 = sor.u32 %s71, %s72
      %p74 = scmp.eq.s32.totalorder %s73, 0
      %s76 = sadd.s32 %s75, 1
      %s77 = scalar_select %p74, %s75, %s76
      %p80 = pneg %p74
      %p81 = scmp.eq.s32.totalorder %s19, 1
      %p82 = por %p80, %p81
      %p83 = scmp.ne.s32.totalorder %s75, %s78
      %p84 = scmp.eq.s32.totalorder %s19, 0
      %p85 = por %p83, %p84
      %p86 = scmp.ne.s32.totalorder %s75, %s78
      %p87 = scmp.eq.s32.totalorder %s24, 1
      %p88 = por %p86, %p87
      %p89 = scmp.ne.s32.totalorder %s78, %s79
      %p90 = scmp.eq.s32.totalorder %s24, 0
      %p91 = por %p89, %p90
      %p92 = scmp.ne.s32.totalorder %s78, %s79
      %p93 = scmp.eq.s32.totalorder %s25, 1
      %p94 = por %p92, %p93
      %p96 = scmp.ne.s32.totalorder %s79, %s95
      %p97 = scmp.eq.s32.totalorder %s25, 0
      %p98 = por %p96, %p97
      %s100 = sadd.s32 %s99, 1
      %p103 = scmp.eq.s32.totalorder %s19, 1
      %p104 = scmp.ne.s32.totalorder %s99, %s101
      %p105 = scmp.eq.s32.totalorder %s19, 0
      %p106 = por %p104, %p105
      %p107 = scmp.ne.s32.totalorder %s99, %s101
      %p108 = scmp.eq.s32.totalorder %s24, 1
      %p109 = por %p107, %p108
      %p110 = scmp.ne.s32.totalorder %s101, %s102
      %p111 = scmp.eq.s32.totalorder %s24, 0
      %p112 = por %p110, %p111
      %p113 = scmp.ne.s32.totalorder %s101, %s102
      %p114 = scmp.eq.s32.totalorder %s25, 1
      %p115 = por %p113, %p114
      %p117 = scmp.ne.s32.totalorder %s102, %s116
      %p118 = scmp.eq.s32.totalorder %s25, 0
      %p119 = por %p117, %p118
      %s121 = sadd.s32 %s120, 1
      %p124 = scmp.eq.s32.totalorder %s19, 1
      %p125 = scmp.ne.s32.totalorder %s120, %s122
      %p126 = scmp.eq.s32.totalorder %s19, 0
      %p127 = por %p125, %p126
      %p128 = scmp.ne.s32.totalorder %s120, %s122
      %p129 = scmp.eq.s32.totalorder %s24, 1
      %p130 = por %p128, %p129
      %p131 = scmp.ne.s32.totalorder %s122, %s123
      %p132 = scmp.eq.s32.totalorder %s24, 0
      %p133 = por %p131, %p132
      %p134 = scmp.ne.s32.totalorder %s122, %s123
      %p135 = scmp.eq.s32.totalorder %s25, 1
      %p136 = por %p134, %p135
      %p138 = scmp.ne.s32.totalorder %s123, %s137
      %p139 = scmp.eq.s32.totalorder %s25, 0
      %p140 = por %p138, %p139
      %s141 = ssub.s32 %s26, %s38
      %s142 = ssub.s32 %s27, %s34
      %s143 = sor.u32 %s141, %s142
      %p144 = scmp.eq.s32.totalorder %s143, 0
      %s146 = sadd.s32 %s145, 1
      %s147 = scalar_select %p144, %s145, %s146
      %p150 = pneg %p144
      %p151 = scmp.eq.s32.totalorder %s19, 1
      %p152 = por %p150, %p151
      %p153 = scmp.ne.s32.totalorder %s145, %s148
      %p154 = scmp.eq.s32.totalorder %s19, 0
      %p155 = por %p153, %p154
      %p156 = scmp.ne.s32.totalorder %s145, %s148
      %p157 = scmp.eq.s32.totalorder %s24, 1
      %p158 = por %p156, %p157
      %p159 = scmp.ne.s32.totalorder %s148, %s149
      %p160 = scmp.eq.s32.totalorder %s24, 0
      %p161 = por %p159, %p160
      %p162 = scmp.ne.s32.totalorder %s148, %s149
      %p163 = scmp.eq.s32.totalorder %s25, 1
      %p164 = por %p162, %p163
      %p166 = scmp.ne.s32.totalorder %s149, %s165
      %p167 = scmp.eq.s32.totalorder %s25, 0
      %p168 = por %p166, %p167
      %p169 = scmp.le.s32.totalorder 1, %s19
      %p170 = scmp.lt.s32.totalorder %s19, 3
      %p171 = pnand %p169, %p170
      %p172 = pneg %p171
      // Predicated region
      $region9: #{tpu_custom_call.1} parent=5 // pred_check
        _
      $region10: #{tpu_custom_call.1} parent=5 // pred_check_branch
        %174 = sbr.rel (%p171) target = $region12
      $region11: #{tpu_custom_call.1} parent=5 // pred_region
        %s175 = ssub.s32 %s19, 1
        // Predicated region
        $region13: #{tpu_custom_call.1} parent=11 // pred_check
          %p176 = pneg %p112
        $region14: #{tpu_custom_call.1} parent=11 // pred_check_branch
          %178 = sbr.rel (%p176) target = $region16
        $region15: #{tpu_custom_call.1} parent=11 // pred_region
          %s180 = ssub.s32 640, 640
          %181 = vsyncadd [#allocation6], %s180
          %s182 = sshll.u32 [#allocation7], 4
          %s183 = int_to_ptr.vmem [resolvable:$true] %s182
          %188 = dma.hbm_to_vmem [thread:$0]  %s2, 640, %s183, [#allocation6], 128, 128, 8
        $region16: #{tpu_custom_call.1} parent=11 // pred_fallthru
          _
        // Predicated region
        $region17: #{tpu_custom_call.1} parent=11 // pred_check
          %p189 = pneg %p133
        $region18: #{tpu_custom_call.1} parent=11 // pred_check_branch
          %191 = sbr.rel (%p189) target = $region20
        $region19: #{tpu_custom_call.1} parent=11 // pred_region
          _
        $region20: #{tpu_custom_call.1} parent=11 // pred_fallthru
          _
      $region12: #{tpu_custom_call.1} parent=5 // pred_fallthru
        _
      %p192 = scmp.lt.s32.totalorder %s19, 2
      // Predicated region
      $region21: #{tpu_custom_call.1} parent=5 // pred_check
        %p193 = pneg %p192
      $region22: #{tpu_custom_call.1} parent=5 // pred_check_branch
        %195 = sbr.rel (%p193) target = $region24
      $region23: #{tpu_custom_call.1} parent=5 // pred_region
        // Predicated region
        $region25: #{tpu_custom_call.1} parent=23 // pred_check
          %p196 = pneg %p53
        $region26: #{tpu_custom_call.1} parent=23 // pred_check_branch
          %198 = sbr.rel (%p196) target = $region28
        $region27: #{tpu_custom_call.1} parent=23 // pred_region
          %s199 = sand.u32 %s43, 1
          %s200 = scalar_lea.sflag [#allocation3], %s199
          %s201 = sand.u32 %s43, 1
          %s202 = smul.addr %s201, 224
          %s203 = scalar_lea.vmem [#allocation2], %s202
          %s204 = smul.u32 14, %s27
          %s205 = ssub.s32 16, %s204
          %p206 = scmp.lt.s32.totalorder %s205, 14
          %s207 = scalar_select %p206, %s205, 14
          %s208 = smul.u32 128, %s207
          %s209 = smul.u32 %s208, 2
          %s211 = ssub.s32 3584, %s209
          %212 = vsyncadd %s200, %s211
          %p213 = scmp.ne.s32.totalorder 0, %s209
          %s214 = smul.addr %s204, 2
          %s215 = smul.addr %s26, 32
          %s216 = sadd.s32 %s214, %s215
          %s217 = smul.addr %s216, 128
          %s218 = scalar_lea.hbm %s0, %s217
          %s219 = smul.u32 %s207, 2
          %s220 = smul.u32 8, %s219
          %s221 = sshll.u32 %s203, 4
          %s222 = int_to_ptr.vmem [resolvable:$true] %s221
          %s223 = sshll.u32 %s220, 4
          %227 = dma.hbm_to_vmem [thread:$0]  (%p213), %s218, %s223, %s222, %s200, 128, 128, 8
        $region28: #{tpu_custom_call.1} parent=23 // pred_fallthru
          _
        // Predicated region
        $region29: #{tpu_custom_call.1} parent=23 // pred_check
          %p228 = pneg %p85
        $region30: #{tpu_custom_call.1} parent=23 // pred_check_branch
          %230 = sbr.rel (%p228) target = $region32
        $region31: #{tpu_custom_call.1} parent=23 // pred_region
          %s231 = sand.u32 %s19, 1
          %s232 = scalar_lea.sflag [#allocation6], %s231
          %s233 = sand.u32 %s75, 1
          %s234 = smul.addr %s233, 16
          %s235 = scalar_lea.vmem [#allocation5], %s234
          %s236 = sadd.s32 %s27, 1
          %s237 = smul.u32 %s236, 14
          %s239 = ssub.s32 256, 256
          %240 = vsyncadd %s232, %s239
          %s241 = smul.addr %s237, 2
          %s242 = smul.addr %s26, 32
          %s243 = sadd.s32 %s241, %s242
          %s244 = smul.addr %s243, 128
          %s245 = scalar_lea.hbm %s1, %s244
          %s246 = sshll.u32 %s235, 4
          %s247 = int_to_ptr.vmem [resolvable:$true] %s246
          %252 = dma.hbm_to_vmem [thread:$0]  %s245, 256, %s247, %s232, 128, 128, 8
        $region32: #{tpu_custom_call.1} parent=23 // pred_fallthru
          _
      $region24: #{tpu_custom_call.1} parent=5 // pred_fallthru
        _
      %p253 = scmp.le.s32.totalorder 1, %s19
      %p254 = scmp.lt.s32.totalorder %s19, 3
      %p255 = pnand %p253, %p254
      %p256 = pneg %p255
      // Predicated region
      $region33: #{tpu_custom_call.1} parent=5 // pred_check
        _
      $region34: #{tpu_custom_call.1} parent=5 // pred_check_branch
        %258 = sbr.rel (%p255) target = $region36
      $region35: #{tpu_custom_call.1} parent=5 // pred_region
        %s259 = ssub.s32 %s19, 1
        %s260 = sand.u32 %s46, 1
        %s261 = scalar_lea.sflag [#allocation3], %s260
        %s262 = sand.u32 %s46, 1
        %s263 = smul.addr %s262, 224
        %s264 = scalar_lea.vmem [#allocation2], %s263
        // Predicated region
        $region37: #{tpu_custom_call.1} parent=35 // pred_check
          %p265 = pneg %p59
        $region38: #{tpu_custom_call.1} parent=35 // pred_check_branch
          %267 = sbr.rel (%p265) target = $region40
        $region39: #{tpu_custom_call.1} parent=35 // pred_region
          %268 = dma.done %s261, 3584
        $region40: #{tpu_custom_call.1} parent=35 // pred_fallthru
          _
        %s269 = sand.u32 %s24, 1
        %s270 = scalar_lea.sflag [#allocation6], %s269
        %s271 = sand.u32 %s78, 1
        %s272 = smul.addr %s271, 16
        %s273 = scalar_lea.vmem [#allocation5], %s272
        // Predicated region
        $region41: #{tpu_custom_call.1} parent=35 // pred_check
          %p274 = pneg %p91
        $region42: #{tpu_custom_call.1} parent=35 // pred_check_branch
          %276 = sbr.rel (%p274) target = $region44
        $region43: #{tpu_custom_call.1} parent=35 // pred_region
          %277 = dma.done %s270, 256
        $region44: #{tpu_custom_call.1} parent=35 // pred_fallthru
          _
        // Predicated region
        $region45: #{tpu_custom_call.1} parent=35 // pred_check
          %p278 = pneg %p112
        $region46: #{tpu_custom_call.1} parent=35 // pred_check_branch
          %280 = sbr.rel (%p278) target = $region48
        $region47: #{tpu_custom_call.1} parent=35 // pred_region
          %281 = dma.done [#allocation6], 640
        $region48: #{tpu_custom_call.1} parent=35 // pred_fallthru
          _
        %s282 = sand.u32 %s46, 1
        %s283 = scalar_lea.sflag [#allocation3], %s282
        %s284 = sand.u32 %s46, 1
        %s285 = smul.addr %s284, 224
        %s286 = scalar_lea.vmem [#allocation2], %s285
        %p287 = pneg %p59
        %p288 = pneg %p56
        %s289 = sand.u32 %s24, 1
        %s290 = scalar_lea.sflag [#allocation6], %s289
        %s291 = sand.u32 %s78, 1
        %s292 = smul.addr %s291, 16
        %s293 = scalar_lea.vmem [#allocation5], %s292
        %p294 = pneg %p91
        %p295 = pneg %p88
        %p296 = pneg %p112
        %p297 = pneg %p109
        %p298 = pneg %p133
        %p299 = pneg %p130
        %p300 = pneg %p161
        %p301 = pneg %p158
        %s302 = sand.u32 %s148, 1
        %s303 = scalar_lea.sflag [#allocation4], %s302
        %s304 = sand.u32 %s148, 1
        %s305 = smul.addr %s304, 7
        %s306 = scalar_lea.vmem [#allocation8], %s305
        %s307 = smul.u32 14, %s29
        %s308 = ssub.s32 16, %s307
        %p309 = scmp.lt.s32.totalorder %s308, 14
        %s310 = scalar_select %p309, %s308, 14
        %s311 = smul.u32 128, %s310
        %s312 = smul.u32 %s311, 2
        %s313 = sadd.s32 %s29, 1
        %s314 = smul.u32 %s313, 14
        %s315 = smul.u32 7, %s29
        %v316 = vld [vmem:[%s264] sm:$0xff]
        %v317 = vld [vmem:[%s264 + $0x8] sm:$0xff]
        %v318 = vld [vmem:[%s264 + $0x10] sm:$0xff]
        %v319 = vld [vmem:[%s264 + $0x18] sm:$0xff]
        %v320 = vld [vmem:[%s264 + $0x20] sm:$0xff]
        %v321 = vld [vmem:[%s264 + $0x28] sm:$0xff]
        %v322 = vld [vmem:[%s264 + $0x30] sm:$0xff]
        %v323 = vld [vmem:[%s264 + $0x38] sm:$0xff]
        %v324 = vld [vmem:[%s264 + $0x40] sm:$0xff]
        %v325 = vld [vmem:[%s264 + $0x48] sm:$0xff]
        %v326 = vld [vmem:[%s264 + $0x50] sm:$0xff]
        %v327 = vld [vmem:[%s264 + $0x58] sm:$0xff]
        %v328 = vld [vmem:[%s264 + $0x60] sm:$0xff]
        %v329 = vld [vmem:[%s264 + $0x68] sm:$0xff]
        %v330 = vld [vmem:[%s264 + $0x70] sm:$0xff]
        %v331 = vld [vmem:[%s264 + $0x78] sm:$0xff]
        %v332 = vld [vmem:[%s264 + $0x80] sm:$0xff]
        %v333 = vld [vmem:[%s264 + $0x88] sm:$0xff]
        %v334 = vld [vmem:[%s264 + $0x90] sm:$0xff]
        %v335 = vld [vmem:[%s264 + $0x98] sm:$0xff]
        %v336 = vld [vmem:[%s264 + $0xa0] sm:$0xff]
        %v337 = vld [vmem:[%s264 + $0xa8] sm:$0xff]
        %v338 = vld [vmem:[%s264 + $0xb0] sm:$0xff]
        %v339 = vld [vmem:[%s264 + $0xb8] sm:$0xff]
        %v340 = vld [vmem:[%s264 + $0xc0] sm:$0xff]
        %v341 = vld [vmem:[%s264 + $0xc8] sm:$0xff]
        %v342 = vld [vmem:[%s264 + $0xd0] sm:$0xff]
        %v343 = vld [vmem:[%s264 + $0xd8] sm:$0xff]
        %v344 = vld [vmem:[%s273] sm:$0xff]
        %v345 = vld [vmem:[%s273 + $0x8] sm:$0xff]
        %v346 = vld [vmem:[#allocation7] sm:$0xff]
        %v347 = vld [vmem:[#allocation7 + $0x8] sm:$0xff]
        %v348 = vld [vmem:[#allocation7 + $0x10] sm:$0xff]
        %v349 = vld [vmem:[#allocation7 + $0x18] sm:$0xff]
        %v350 = vld [vmem:[#allocation7 + $0x20] sm:$0xf]
        %v351 = vld [vmem:[%s3] sm:$0x1]
        %v353 = vlaneseq
        %v354 = vshrl.u32 %v353, 7
        %v355 = vsub.s32 0, %v354
        %v356 = vrot.slane %v351, %v355
        %vm358 = vcmask 293888
        %v360 = vsel %vm358, %v316, 0
        %v363 = vsel %vm358, %v317, 0
        %v366 = vsel %vm358, %v318, 0
        %v369 = vsel %vm358, %v319, 0
        %v372 = vsel %vm358, %v320, 0
        %v375 = vsel %vm358, %v321, 0
        %v378 = vsel %vm358, %v322, 0
        %v381 = vsel %vm358, %v323, 0
        %v384 = vsel %vm358, %v324, 0
        %v387 = vsel %vm358, %v325, 0
        %v390 = vsel %vm358, %v326, 0
        %v393 = vsel %vm358, %v327, 0
        %v396 = vsel %vm358, %v328, 0
        %v399 = vsel %vm358, %v329, 0
        %v402 = vsel %vm358, %v330, 0
        %v405 = vsel %vm358, %v331, 0
        %v408 = vsel %vm358, %v332, 0
        %v411 = vsel %vm358, %v333, 0
        %v414 = vsel %vm358, %v334, 0
        %v417 = vsel %vm358, %v335, 0
        %v420 = vsel %vm358, %v336, 0
        %v423 = vsel %vm358, %v337, 0
        %v426 = vsel %vm358, %v338, 0
        %v429 = vsel %vm358, %v339, 0
        %v432 = vsel %vm358, %v340, 0
        %v435 = vsel %vm358, %v341, 0
        %v438 = vsel %vm358, %v342, 0
        %v441 = vsel %vm358, %v343, 0
        %v444 = vsel %vm358, %v344, 0
        %v447 = vsel %vm358, %v345, 0
        %vm449 = vcmask 1043456
        %v451 = vsel %vm449, %v350, 0
        %453 = vmatprep.subr.mxu0 0.0
        %454 = vmatpush1.msra.mxu0 0.0
        %455 = vmatprep.subr.mxu0 0.0
        %456 = vmatpush1.msra.mxu0 0.0
        %457 = vmatprep.subr.mxu0 0.0
        %458 = vmatpush1.msra.mxu0 0.0
        %459 = vmatprep.subr.mxu0 0.0
        %460 = vmatpush1.msra.mxu0 0.0
        %461 = vmatprep.subr.mxu0 0.0
        %462 = vmatpush1.msra.mxu0 0.0
        %463 = vmatprep.subr.mxu0 0.0
        %464 = vmatpush1.msra.mxu0 0.0
        %465 = vmatprep.subr.mxu0 0.0
        %466 = vmatpush1.msra.mxu0 0.0
        %467 = vmatprep.subr.mxu0 0.0
        %468 = vmatpush1.msra.mxu0 0.0
        %469 = vmatprep.subr.mxu0 0.0
        %470 = vmatpush1.msra.mxu0 0.0
        %471 = vmatprep.subr.mxu0 0.0
        %472 = vmatpush1.msra.mxu0 0.0
        %473 = vmatprep.subr.mxu0 0.0
        %474 = vmatpush1.msra.mxu0 0.0
        %475 = vmatprep.subr.mxu0 0.0
        %476 = vmatpush1.msra.mxu0 %v451
        %477 = vmatprep.subr.mxu0 0.0
        %478 = vmatpush1.msra.mxu0 %v349
        %479 = vmatprep.subr.mxu0 0.0
        %480 = vmatpush1.msra.mxu0 %v348
        %481 = vmatprep.subr.mxu0 0.0
        %482 = vmatpush1.msra.mxu0 %v347
        %483 = vmatprep.subr.mxu0 0.0
        %484 = vmatpush1.msra.mxu0 %v346
        %485 = vmatprep.subr.mxu0 0.0
        %486 = vmatpush2.msra.mxu0 0.0
        %487 = vmatprep.subr.mxu0 0.0
        %488 = vmatpush2.msra.mxu0 0.0
        %489 = vmatprep.subr.mxu0 0.0
        %490 = vmatpush2.msra.mxu0 0.0
        %491 = vmatprep.subr.mxu0 0.0
        %492 = vmatpush2.msra.mxu0 0.0
        %493 = vmatprep.subr.mxu0 0.0
        %494 = vmatpush2.msra.mxu0 0.0
        %495 = vmatprep.subr.mxu0 0.0
        %496 = vmatpush2.msra.mxu0 0.0
        %497 = vmatprep.subr.mxu0 0.0
        %498 = vmatpush2.msra.mxu0 0.0
        %499 = vmatprep.subr.mxu0 0.0
        %500 = vmatpush2.msra.mxu0 0.0
        %501 = vmatprep.subr.mxu0 0.0
        %502 = vmatpush2.msra.mxu0 0.0
        %503 = vmatprep.subr.mxu0 0.0
        %504 = vmatpush2.msra.mxu0 0.0
        %505 = vmatprep.subr.mxu0 0.0
        %506 = vmatpush2.msra.mxu0 0.0
        %507 = vmatprep.subr.mxu0 0.0
        %508 = vmatpush2.msra.mxu0 0.0
        %509 = vmatprep.subr.mxu0 0.0
        %510 = vmatpush2.msra.mxu0 0.0
        %511 = vmatprep.subr.mxu0 0.0
        %512 = vmatpush2.msra.mxu0 0.0
        %513 = vmatprep.subr.mxu0 0.0
        %514 = vmatpush2.msra.mxu0 0.0
        %515 = vmatprep.subr.mxu0 0.0
        %516 = vmatpush2.msra.mxu0 0.0
        %517 = vmatprep.mubr.f32.mxu0 0.0
        %518 = vmatmul.mubr.f32.gmra.mxu0 %v360
        %v519 = vpop.f32.mrf.mxu0
        %v520 = vadd.f32 %v356, %v519
        %v521 = vpop.f32.mrf.mxu0
        %522 = vmatprep.mubr.f32.mxu0 0.0
        %523 = vmatmul.mubr.f32.gmra.mxu0 %v363
        %v524 = vpop.f32.mrf.mxu0
        %v525 = vadd.f32 %v356, %v524
        %v526 = vpop.f32.mrf.mxu0
        %527 = vmatprep.mubr.f32.mxu0 0.0
        %528 = vmatmul.mubr.f32.gmra.mxu0 %v366
        %v529 = vpop.f32.mrf.mxu0
        %v530 = vadd.f32 %v356, %v529
        %v531 = vpop.f32.mrf.mxu0
        %532 = vmatprep.mubr.f32.mxu0 0.0
        %533 = vmatmul.mubr.f32.gmra.mxu0 %v369
        %v534 = vpop.f32.mrf.mxu0
        %v535 = vadd.f32 %v356, %v534
        %v536 = vpop.f32.mrf.mxu0
        %537 = vmatprep.mubr.f32.mxu0 0.0
        %538 = vmatmul.mubr.f32.gmra.mxu0 %v372
        %v539 = vpop.f32.mrf.mxu0
        %v540 = vadd.f32 %v356, %v539
        %v541 = vpop.f32.mrf.mxu0
        %542 = vmatprep.mubr.f32.mxu0 0.0
        %543 = vmatmul.mubr.f32.gmra.mxu0 %v375
        %v544 = vpop.f32.mrf.mxu0
        %v545 = vadd.f32 %v356, %v544
        %v546 = vpop.f32.mrf.mxu0
        %547 = vmatprep.mubr.f32.mxu0 0.0
        %548 = vmatmul.mubr.f32.gmra.mxu0 %v378
        %v549 = vpop.f32.mrf.mxu0
        %v550 = vadd.f32 %v356, %v549
        %v551 = vpop.f32.mrf.mxu0
        %552 = vmatprep.mubr.f32.mxu0 0.0
        %553 = vmatmul.mubr.f32.gmra.mxu0 %v381
        %v554 = vpop.f32.mrf.mxu0
        %v555 = vadd.f32 %v356, %v554
        %v556 = vpop.f32.mrf.mxu0
        %557 = vmatprep.mubr.f32.mxu0 0.0
        %558 = vmatmul.mubr.f32.gmra.mxu0 %v384
        %v559 = vpop.f32.mrf.mxu0
        %v560 = vadd.f32 %v356, %v559
        %v561 = vpop.f32.mrf.mxu0
        %562 = vmatprep.mubr.f32.mxu0 0.0
        %563 = vmatmul.mubr.f32.gmra.mxu0 %v387
        %v564 = vpop.f32.mrf.mxu0
        %v565 = vadd.f32 %v356, %v564
        %v566 = vpop.f32.mrf.mxu0
        %567 = vmatprep.mubr.f32.mxu0 0.0
        %568 = vmatmul.mubr.f32.gmra.mxu0 %v390
        %v569 = vpop.f32.mrf.mxu0
        %v570 = vadd.f32 %v356, %v569
        %v571 = vpop.f32.mrf.mxu0
        %572 = vmatprep.mubr.f32.mxu0 0.0
        %573 = vmatmul.mubr.f32.gmra.mxu0 %v393
        %v574 = vpop.f32.mrf.mxu0
        %v575 = vadd.f32 %v356, %v574
        %v576 = vpop.f32.mrf.mxu0
        %577 = vmatprep.mubr.f32.mxu0 0.0
        %578 = vmatmul.mubr.f32.gmra.mxu0 %v396
        %v579 = vpop.f32.mrf.mxu0
        %v580 = vadd.f32 %v356, %v579
        %v581 = vpop.f32.mrf.mxu0
        %582 = vmatprep.mubr.f32.mxu0 0.0
        %583 = vmatmul.mubr.f32.gmra.mxu0 %v399
        %v584 = vpop.f32.mrf.mxu0
        %v585 = vadd.f32 %v356, %v584
        %v586 = vpop.f32.mrf.mxu0
        %587 = vmatprep.mubr.f32.mxu0 0.0
        %588 = vmatmul.mubr.f32.gmra.mxu0 %v402
        %v589 = vpop.f32.mrf.mxu0
        %v590 = vadd.f32 %v356, %v589
        %v591 = vpop.f32.mrf.mxu0
        %592 = vmatprep.mubr.f32.mxu0 0.0
        %593 = vmatmul.mubr.f32.gmra.mxu0 %v405
        %v594 = vpop.f32.mrf.mxu0
        %v595 = vadd.f32 %v356, %v594
        %v596 = vpop.f32.mrf.mxu0
        %597 = vmatprep.mubr.f32.mxu0 0.0
        %598 = vmatmul.mubr.f32.gmra.mxu0 %v408
        %v599 = vpop.f32.mrf.mxu0
        %v600 = vadd.f32 %v356, %v599
        %v601 = vpop.f32.mrf.mxu0
        %602 = vmatprep.mubr.f32.mxu0 0.0
        %603 = vmatmul.mubr.f32.gmra.mxu0 %v411
        %v604 = vpop.f32.mrf.mxu0
        %v605 = vadd.f32 %v356, %v604
        %v606 = vpop.f32.mrf.mxu0
        %607 = vmatprep.mubr.f32.mxu0 0.0
        %608 = vmatmul.mubr.f32.gmra.mxu0 %v414
        %v609 = vpop.f32.mrf.mxu0
        %v610 = vadd.f32 %v356, %v609
        %v611 = vpop.f32.mrf.mxu0
        %612 = vmatprep.mubr.f32.mxu0 0.0
        %613 = vmatmul.mubr.f32.gmra.mxu0 %v417
        %v614 = vpop.f32.mrf.mxu0
        %v615 = vadd.f32 %v356, %v614
        %v616 = vpop.f32.mrf.mxu0
        %617 = vmatprep.mubr.f32.mxu0 0.0
        %618 = vmatmul.mubr.f32.gmra.mxu0 %v420
        %v619 = vpop.f32.mrf.mxu0
        %v620 = vadd.f32 %v356, %v619
        %v621 = vpop.f32.mrf.mxu0
        %622 = vmatprep.mubr.f32.mxu0 0.0
        %623 = vmatmul.mubr.f32.gmra.mxu0 %v423
        %v624 = vpop.f32.mrf.mxu0
        %v625 = vadd.f32 %v356, %v624
        %v626 = vpop.f32.mrf.mxu0
        %627 = vmatprep.mubr.f32.mxu0 0.0
        %628 = vmatmul.mubr.f32.gmra.mxu0 %v426
        %v629 = vpop.f32.mrf.mxu0
        %v630 = vadd.f32 %v356, %v629
        %v631 = vpop.f32.mrf.mxu0
        %632 = vmatprep.mubr.f32.mxu0 0.0
        %633 = vmatmul.mubr.f32.gmra.mxu0 %v429
        %v634 = vpop.f32.mrf.mxu0
        %v635 = vadd.f32 %v356, %v634
        %v636 = vpop.f32.mrf.mxu0
        %637 = vmatprep.mubr.f32.mxu0 0.0
        %638 = vmatmul.mubr.f32.gmra.mxu0 %v432
        %v639 = vpop.f32.mrf.mxu0
        %v640 = vadd.f32 %v356, %v639
        %v641 = vpop.f32.mrf.mxu0
        %642 = vmatprep.mubr.f32.mxu0 0.0
        %643 = vmatmul.mubr.f32.gmra.mxu0 %v435
        %v644 = vpop.f32.mrf.mxu0
        %v645 = vadd.f32 %v356, %v644
        %v646 = vpop.f32.mrf.mxu0
        %647 = vmatprep.mubr.f32.mxu0 0.0
        %648 = vmatmul.mubr.f32.gmra.mxu0 %v438
        %v649 = vpop.f32.mrf.mxu0
        %v650 = vadd.f32 %v356, %v649
        %v651 = vpop.f32.mrf.mxu0
        %652 = vmatprep.mubr.f32.mxu0 0.0
        %653 = vmatmul.mubr.f32.gmra.mxu0 %v441
        %v654 = vpop.f32.mrf.mxu0
        %v655 = vadd.f32 %v356, %v654
        %v656 = vpop.f32.mrf.mxu0
        %657 = vmatprep.mubr.f32.mxu0 0.0
        %658 = vmatmul.mubr.f32.gmra.mxu0 %v444
        %v659 = vpop.f32.mrf.mxu0
        %v660 = vadd.f32 %v356, %v659
        %v661 = vpop.f32.mrf.mxu0
        %662 = vmatprep.mubr.f32.mxu0 0.0
        %663 = vmatmul.mubr.f32.gmra.mxu0 %v447
        %v664 = vpop.f32.mrf.mxu0
        %v665 = vadd.f32 %v356, %v664
        %v666 = vpop.f32.mrf.mxu0
        %667 = vdwg.mxu0
        %v668 = vmax.f32 %v520, 0.0
        %v669 = vmax.f32 %v525, 0.0
        %v670 = vmax.f32 %v530, 0.0
        %v671 = vmax.f32 %v535, 0.0
        %v672 = vmax.f32 %v540, 0.0
        %v673 = vmax.f32 %v545, 0.0
        %v674 = vmax.f32 %v550, 0.0
        %v675 = vmax.f32 %v555, 0.0
        %v676 = vmax.f32 %v560, 0.0
        %v677 = vmax.f32 %v565, 0.0
        %v678 = vmax.f32 %v570, 0.0
        %v679 = vmax.f32 %v575, 0.0
        %v680 = vmax.f32 %v580, 0.0
        %v681 = vmax.f32 %v585, 0.0
        %v682 = vmax.f32 %v590, 0.0
        %v683 = vmax.f32 %v595, 0.0
        %v684 = vmax.f32 %v600, 0.0
        %v685 = vmax.f32 %v605, 0.0
        %v686 = vmax.f32 %v610, 0.0
        %v687 = vmax.f32 %v615, 0.0
        %v688 = vmax.f32 %v620, 0.0
        %v689 = vmax.f32 %v625, 0.0
        %v690 = vmax.f32 %v630, 0.0
        %v691 = vmax.f32 %v635, 0.0
        %v692 = vmax.f32 %v640, 0.0
        %v693 = vmax.f32 %v645, 0.0
        %v694 = vmax.f32 %v650, 0.0
        %v695 = vmax.f32 %v655, 0.0
        %v696 = vmax.f32 %v660, 0.0
        %v697 = vmax.f32 %v665, 0.0
        %v698 = vmul.f32 %v668, %v668
        %v699 = vmul.f32 %v669, %v669
        %v700 = vmul.f32 %v670, %v670
        %v701 = vmul.f32 %v671, %v671
        %v702 = vmul.f32 %v672, %v672
        %v703 = vmul.f32 %v673, %v673
        %v704 = vmul.f32 %v674, %v674
        %v705 = vmul.f32 %v675, %v675
        %v706 = vmul.f32 %v676, %v676
        %v707 = vmul.f32 %v677, %v677
        %v708 = vmul.f32 %v678, %v678
        %v709 = vmul.f32 %v679, %v679
        %v710 = vmul.f32 %v680, %v680
        %v711 = vmul.f32 %v681, %v681
        %v712 = vmul.f32 %v682, %v682
        %v713 = vmul.f32 %v683, %v683
        %v714 = vmul.f32 %v684, %v684
        %v715 = vmul.f32 %v685, %v685
        %v716 = vmul.f32 %v686, %v686
        %v717 = vmul.f32 %v687, %v687
        %v718 = vmul.f32 %v688, %v688
        %v719 = vmul.f32 %v689, %v689
        %v720 = vmul.f32 %v690, %v690
        %v721 = vmul.f32 %v691, %v691
        %v722 = vmul.f32 %v692, %v692
        %v723 = vmul.f32 %v693, %v693
        %v724 = vmul.f32 %v694, %v694
        %v725 = vmul.f32 %v695, %v695
        %v726 = vmul.f32 %v696, %v696
        %v727 = vmul.f32 %v697, %v697
        %728 = vrot.lane.b32.xlu0 %v698, 2
        %v729 = vpop.permute.xlu0 %728
        %730 = vrot.lane.b32.xlu0 %v699, 2
        %v731 = vpop.permute.xlu0 %730
        %732 = vrot.lane.b32.xlu0 %v700, 2
        %v733 = vpop.permute.xlu0 %732
        %734 = vrot.lane.b32.xlu0 %v701, 2
        %v735 = vpop.permute.xlu0 %734
        %736 = vrot.lane.b32.xlu0 %v702, 2
        %v737 = vpop.permute.xlu0 %736
        %738 = vrot.lane.b32.xlu0 %v703, 2
        %v739 = vpop.permute.xlu0 %738
        %740 = vrot.lane.b32.xlu0 %v704, 2
        %v741 = vpop.permute.xlu0 %740
        %742 = vrot.lane.b32.xlu0 %v705, 2
        %v743 = vpop.permute.xlu0 %742
        %744 = vrot.lane.b32.xlu0 %v706, 2
        %v745 = vpop.permute.xlu0 %744
        %746 = vrot.lane.b32.xlu0 %v707, 2
        %v747 = vpop.permute.xlu0 %746
        %748 = vrot.lane.b32.xlu0 %v708, 2
        %v749 = vpop.permute.xlu0 %748
        %750 = vrot.lane.b32.xlu0 %v709, 2
        %v751 = vpop.permute.xlu0 %750
        %752 = vrot.lane.b32.xlu0 %v710, 2
        %v753 = vpop.permute.xlu0 %752
        %754 = vrot.lane.b32.xlu0 %v711, 2
        %v755 = vpop.permute.xlu0 %754
        %756 = vrot.lane.b32.xlu0 %v712, 2
        %v757 = vpop.permute.xlu0 %756
        %758 = vrot.lane.b32.xlu0 %v713, 2
        %v759 = vpop.permute.xlu0 %758
        %760 = vrot.lane.b32.xlu0 %v714, 2
        %v761 = vpop.permute.xlu0 %760
        %762 = vrot.lane.b32.xlu0 %v715, 2
        %v763 = vpop.permute.xlu0 %762
        %764 = vrot.lane.b32.xlu0 %v716, 2
        %v765 = vpop.permute.xlu0 %764
        %766 = vrot.lane.b32.xlu0 %v717, 2
        %v767 = vpop.permute.xlu0 %766
        %768 = vrot.lane.b32.xlu0 %v718, 2
        %v769 = vpop.permute.xlu0 %768
        %770 = vrot.lane.b32.xlu0 %v719, 2
        %v771 = vpop.permute.xlu0 %770
        %772 = vrot.lane.b32.xlu0 %v720, 2
        %v773 = vpop.permute.xlu0 %772
        %774 = vrot.lane.b32.xlu0 %v721, 2
        %v775 = vpop.permute.xlu0 %774
        %776 = vrot.lane.b32.xlu0 %v722, 2
        %v777 = vpop.permute.xlu0 %776
        %778 = vrot.lane.b32.xlu0 %v723, 2
        %v779 = vpop.permute.xlu0 %778
        %780 = vrot.lane.b32.xlu0 %v724, 2
        %v781 = vpop.permute.xlu0 %780
        %782 = vrot.lane.b32.xlu0 %v725, 2
        %v783 = vpop.permute.xlu0 %782
        %784 = vrot.lane.b32.xlu0 %v726, 2
        %v785 = vpop.permute.xlu0 %784
        %786 = vrot.lane.b32.xlu0 %v727, 2
        %v787 = vpop.permute.xlu0 %786
        %v788 = vadd.f32 %v698, %v729
        %v789 = vadd.f32 %v699, %v731
        %v790 = vadd.f32 %v700, %v733
        %v791 = vadd.f32 %v701, %v735
        %v792 = vadd.f32 %v702, %v737
        %v793 = vadd.f32 %v703, %v739
        %v794 = vadd.f32 %v704, %v741
        %v795 = vadd.f32 %v705, %v743
        %v796 = vadd.f32 %v706, %v745
        %v797 = vadd.f32 %v707, %v747
        %v798 = vadd.f32 %v708, %v749
        %v799 = vadd.f32 %v709, %v751
        %v800 = vadd.f32 %v710, %v753
        %v801 = vadd.f32 %v711, %v755
        %v802 = vadd.f32 %v712, %v757
        %v803 = vadd.f32 %v713, %v759
        %v804 = vadd.f32 %v714, %v761
        %v805 = vadd.f32 %v715, %v763
        %v806 = vadd.f32 %v716, %v765
        %v807 = vadd.f32 %v717, %v767
        %v808 = vadd.f32 %v718, %v769
        %v809 = vadd.f32 %v719, %v771
        %v810 = vadd.f32 %v720, %v773
        %v811 = vadd.f32 %v721, %v775
        %v812 = vadd.f32 %v722, %v777
        %v813 = vadd.f32 %v723, %v779
        %v814 = vadd.f32 %v724, %v781
        %v815 = vadd.f32 %v725, %v783
        %v816 = vadd.f32 %v726, %v785
        %v817 = vadd.f32 %v727, %v787
        %818 = vrot.lane.b32.xlu0 %v698, 1
        %v819 = vpop.permute.xlu0 %818
        %820 = vrot.lane.b32.xlu0 %v699, 1
        %v821 = vpop.permute.xlu0 %820
        %822 = vrot.lane.b32.xlu0 %v700, 1
        %v823 = vpop.permute.xlu0 %822
        %824 = vrot.lane.b32.xlu0 %v701, 1
        %v825 = vpop.permute.xlu0 %824
        %826 = vrot.lane.b32.xlu0 %v702, 1
        %v827 = vpop.permute.xlu0 %826
        %828 = vrot.lane.b32.xlu0 %v703, 1
        %v829 = vpop.permute.xlu0 %828
        %830 = vrot.lane.b32.xlu0 %v704, 1
        %v831 = vpop.permute.xlu0 %830
        %832 = vrot.lane.b32.xlu0 %v705, 1
        %v833 = vpop.permute.xlu0 %832
        %834 = vrot.lane.b32.xlu0 %v706, 1
        %v835 = vpop.permute.xlu0 %834
        %836 = vrot.lane.b32.xlu0 %v707, 1
        %v837 = vpop.permute.xlu0 %836
        %838 = vrot.lane.b32.xlu0 %v708, 1
        %v839 = vpop.permute.xlu0 %838
        %840 = vrot.lane.b32.xlu0 %v709, 1
        %v841 = vpop.permute.xlu0 %840
        %842 = vrot.lane.b32.xlu0 %v710, 1
        %v843 = vpop.permute.xlu0 %842
        %844 = vrot.lane.b32.xlu0 %v711, 1
        %v845 = vpop.permute.xlu0 %844
        %846 = vrot.lane.b32.xlu0 %v712, 1
        %v847 = vpop.permute.xlu0 %846
        %848 = vrot.lane.b32.xlu0 %v713, 1
        %v849 = vpop.permute.xlu0 %848
        %850 = vrot.lane.b32.xlu0 %v714, 1
        %v851 = vpop.permute.xlu0 %850
        %852 = vrot.lane.b32.xlu0 %v715, 1
        %v853 = vpop.permute.xlu0 %852
        %854 = vrot.lane.b32.xlu0 %v716, 1
        %v855 = vpop.permute.xlu0 %854
        %856 = vrot.lane.b32.xlu0 %v717, 1
        %v857 = vpop.permute.xlu0 %856
        %858 = vrot.lane.b32.xlu0 %v718, 1
        %v859 = vpop.permute.xlu0 %858
        %860 = vrot.lane.b32.xlu0 %v719, 1
        %v861 = vpop.permute.xlu0 %860
        %862 = vrot.lane.b32.xlu0 %v720, 1
        %v863 = vpop.permute.xlu0 %862
        %864 = vrot.lane.b32.xlu0 %v721, 1
        %v865 = vpop.permute.xlu0 %864
        %866 = vrot.lane.b32.xlu0 %v722, 1
        %v867 = vpop.permute.xlu0 %866
        %868 = vrot.lane.b32.xlu0 %v723, 1
        %v869 = vpop.permute.xlu0 %868
        %870 = vrot.lane.b32.xlu0 %v724, 1
        %v871 = vpop.permute.xlu0 %870
        %872 = vrot.lane.b32.xlu0 %v725, 1
        %v873 = vpop.permute.xlu0 %872
        %874 = vrot.lane.b32.xlu0 %v726, 1
        %v875 = vpop.permute.xlu0 %874
        %876 = vrot.lane.b32.xlu0 %v727, 1
        %v877 = vpop.permute.xlu0 %876
        %v878 = vadd.f32 %v788, %v819
        %v879 = vadd.f32 %v789, %v821
        %v880 = vadd.f32 %v790, %v823
        %v881 = vadd.f32 %v791, %v825
        %v882 = vadd.f32 %v792, %v827
        %v883 = vadd.f32 %v793, %v829
        %v884 = vadd.f32 %v794, %v831
        %v885 = vadd.f32 %v795, %v833
        %v886 = vadd.f32 %v796, %v835
        %v887 = vadd.f32 %v797, %v837
        %v888 = vadd.f32 %v798, %v839
        %v889 = vadd.f32 %v799, %v841
        %v890 = vadd.f32 %v800, %v843
        %v891 = vadd.f32 %v801, %v845
        %v892 = vadd.f32 %v802, %v847
        %v893 = vadd.f32 %v803, %v849
        %v894 = vadd.f32 %v804, %v851
        %v895 = vadd.f32 %v805, %v853
        %v896 = vadd.f32 %v806, %v855
        %v897 = vadd.f32 %v807, %v857
        %v898 = vadd.f32 %v808, %v859
        %v899 = vadd.f32 %v809, %v861
        %v900 = vadd.f32 %v810, %v863
        %v901 = vadd.f32 %v811, %v865
        %v902 = vadd.f32 %v812, %v867
        %v903 = vadd.f32 %v813, %v869
        %v904 = vadd.f32 %v814, %v871
        %v905 = vadd.f32 %v815, %v873
        %v906 = vadd.f32 %v816, %v875
        %v907 = vadd.f32 %v817, %v877
        %908 = vrot.lane.b32.xlu0 %v698, 127
        %v909 = vpop.permute.xlu0 %908
        %910 = vrot.lane.b32.xlu0 %v699, 127
        %v911 = vpop.permute.xlu0 %910
        %912 = vrot.lane.b32.xlu0 %v700, 127
        %v913 = vpop.permute.xlu0 %912
        %914 = vrot.lane.b32.xlu0 %v701, 127
        %v915 = vpop.permute.xlu0 %914
        %916 = vrot.lane.b32.xlu0 %v702, 127
        %v917 = vpop.permute.xlu0 %916
        %918 = vrot.lane.b32.xlu0 %v703, 127
        %v919 = vpop.permute.xlu0 %918
        %920 = vrot.lane.b32.xlu0 %v704, 127
        %v921 = vpop.permute.xlu0 %920
        %922 = vrot.lane.b32.xlu0 %v705, 127
        %v923 = vpop.permute.xlu0 %922
        %924 = vrot.lane.b32.xlu0 %v706, 127
        %v925 = vpop.permute.xlu0 %924
        %926 = vrot.lane.b32.xlu0 %v707, 127
        %v927 = vpop.permute.xlu0 %926
        %928 = vrot.lane.b32.xlu0 %v708, 127
        %v929 = vpop.permute.xlu0 %928
        %930 = vrot.lane.b32.xlu0 %v709, 127
        %v931 = vpop.permute.xlu0 %930
        %932 = vrot.lane.b32.xlu0 %v710, 127
        %v933 = vpop.permute.xlu0 %932
        %934 = vrot.lane.b32.xlu0 %v711, 127
        %v935 = vpop.permute.xlu0 %934
        %936 = vrot.lane.b32.xlu0 %v712, 127
        %v937 = vpop.permute.xlu0 %936
        %938 = vrot.lane.b32.xlu0 %v713, 127
        %v939 = vpop.permute.xlu0 %938
        %940 = vrot.lane.b32.xlu0 %v714, 127
        %v941 = vpop.permute.xlu0 %940
        %942 = vrot.lane.b32.xlu0 %v715, 127
        %v943 = vpop.permute.xlu0 %942
        %944 = vrot.lane.b32.xlu0 %v716, 127
        %v945 = vpop.permute.xlu0 %944
        %946 = vrot.lane.b32.xlu0 %v717, 127
        %v947 = vpop.permute.xlu0 %946
        %948 = vrot.lane.b32.xlu0 %v718, 127
        %v949 = vpop.permute.xlu0 %948
        %950 = vrot.lane.b32.xlu0 %v719, 127
        %v951 = vpop.permute.xlu0 %950
        %952 = vrot.lane.b32.xlu0 %v720, 127
        %v953 = vpop.permute.xlu0 %952
        %954 = vrot.lane.b32.xlu0 %v721, 127
        %v955 = vpop.permute.xlu0 %954
        %956 = vrot.lane.b32.xlu0 %v722, 127
        %v957 = vpop.permute.xlu0 %956
        %958 = vrot.lane.b32.xlu0 %v723, 127
        %v959 = vpop.permute.xlu0 %958
        %960 = vrot.lane.b32.xlu0 %v724, 127
        %v961 = vpop.permute.xlu0 %960
        %962 = vrot.lane.b32.xlu0 %v725, 127
        %v963 = vpop.permute.xlu0 %962
        %964 = vrot.lane.b32.xlu0 %v726, 127
        %v965 = vpop.permute.xlu0 %964
        %966 = vrot.lane.b32.xlu0 %v727, 127
        %v967 = vpop.permute.xlu0 %966
        %v968 = vadd.f32 %v878, %v909
        %v969 = vadd.f32 %v879, %v911
        %v970 = vadd.f32 %v880, %v913
        %v971 = vadd.f32 %v881, %v915
        %v972 = vadd.f32 %v882, %v917
        %v973 = vadd.f32 %v883, %v919
        %v974 = vadd.f32 %v884, %v921
        %v975 = vadd.f32 %v885, %v923
        %v976 = vadd.f32 %v886, %v925
        %v977 = vadd.f32 %v887, %v927
        %v978 = vadd.f32 %v888, %v929
        %v979 = vadd.f32 %v889, %v931
        %v980 = vadd.f32 %v890, %v933
        %v981 = vadd.f32 %v891, %v935
        %v982 = vadd.f32 %v892, %v937
        %v983 = vadd.f32 %v893, %v939
        %v984 = vadd.f32 %v894, %v941
        %v985 = vadd.f32 %v895, %v943
        %v986 = vadd.f32 %v896, %v945
        %v987 = vadd.f32 %v897, %v947
        %v988 = vadd.f32 %v898, %v949
        %v989 = vadd.f32 %v899, %v951
        %v990 = vadd.f32 %v900, %v953
        %v991 = vadd.f32 %v901, %v955
        %v992 = vadd.f32 %v902, %v957
        %v993 = vadd.f32 %v903, %v959
        %v994 = vadd.f32 %v904, %v961
        %v995 = vadd.f32 %v905, %v963
        %v996 = vadd.f32 %v906, %v965
        %v997 = vadd.f32 %v907, %v967
        %998 = vrot.lane.b32.xlu0 %v698, 126
        %v999 = vpop.permute.xlu0 %998
        %1000 = vrot.lane.b32.xlu0 %v699, 126
        %v1001 = vpop.permute.xlu0 %1000
        %1002 = vrot.lane.b32.xlu0 %v700, 126
        %v1003 = vpop.permute.xlu0 %1002
        %1004 = vrot.lane.b32.xlu0 %v701, 126
        %v1005 = vpop.permute.xlu0 %1004
        %1006 = vrot.lane.b32.xlu0 %v702, 126
        %v1007 = vpop.permute.xlu0 %1006
        %1008 = vrot.lane.b32.xlu0 %v703, 126
        %v1009 = vpop.permute.xlu0 %1008
        %1010 = vrot.lane.b32.xlu0 %v704, 126
        %v1011 = vpop.permute.xlu0 %1010
        %1012 = vrot.lane.b32.xlu0 %v705, 126
        %v1013 = vpop.permute.xlu0 %1012
        %1014 = vrot.lane.b32.xlu0 %v706, 126
        %v1015 = vpop.permute.xlu0 %1014
        %1016 = vrot.lane.b32.xlu0 %v707, 126
        %v1017 = vpop.permute.xlu0 %1016
        %1018 = vrot.lane.b32.xlu0 %v708, 126
        %v1019 = vpop.permute.xlu0 %1018
        %1020 = vrot.lane.b32.xlu0 %v709, 126
        %v1021 = vpop.permute.xlu0 %1020
        %1022 = vrot.lane.b32.xlu0 %v710, 126
        %v1023 = vpop.permute.xlu0 %1022
        %1024 = vrot.lane.b32.xlu0 %v711, 126
        %v1025 = vpop.permute.xlu0 %1024
        %1026 = vrot.lane.b32.xlu0 %v712, 126
        %v1027 = vpop.permute.xlu0 %1026
        %1028 = vrot.lane.b32.xlu0 %v713, 126
        %v1029 = vpop.permute.xlu0 %1028
        %1030 = vrot.lane.b32.xlu0 %v714, 126
        %v1031 = vpop.permute.xlu0 %1030
        %1032 = vrot.lane.b32.xlu0 %v715, 126
        %v1033 = vpop.permute.xlu0 %1032
        %1034 = vrot.lane.b32.xlu0 %v716, 126
        %v1035 = vpop.permute.xlu0 %1034
        %1036 = vrot.lane.b32.xlu0 %v717, 126
        %v1037 = vpop.permute.xlu0 %1036
        %1038 = vrot.lane.b32.xlu0 %v718, 126
        %v1039 = vpop.permute.xlu0 %1038
        %1040 = vrot.lane.b32.xlu0 %v719, 126
        %v1041 = vpop.permute.xlu0 %1040
        %1042 = vrot.lane.b32.xlu0 %v720, 126
        %v1043 = vpop.permute.xlu0 %1042
        %1044 = vrot.lane.b32.xlu0 %v721, 126
        %v1045 = vpop.permute.xlu0 %1044
        %1046 = vrot.lane.b32.xlu0 %v722, 126
        %v1047 = vpop.permute.xlu0 %1046
        %1048 = vrot.lane.b32.xlu0 %v723, 126
        %v1049 = vpop.permute.xlu0 %1048
        %1050 = vrot.lane.b32.xlu0 %v724, 126
        %v1051 = vpop.permute.xlu0 %1050
        %1052 = vrot.lane.b32.xlu0 %v725, 126
        %v1053 = vpop.permute.xlu0 %1052
        %1054 = vrot.lane.b32.xlu0 %v726, 126
        %v1055 = vpop.permute.xlu0 %1054
        %1056 = vrot.lane.b32.xlu0 %v727, 126
        %v1057 = vpop.permute.xlu0 %1056
        %v1058 = vadd.f32 %v968, %v999
        %v1059 = vadd.f32 %v969, %v1001
        %v1060 = vadd.f32 %v970, %v1003
        %v1061 = vadd.f32 %v971, %v1005
        %v1062 = vadd.f32 %v972, %v1007
        %v1063 = vadd.f32 %v973, %v1009
        %v1064 = vadd.f32 %v974, %v1011
        %v1065 = vadd.f32 %v975, %v1013
        %v1066 = vadd.f32 %v976, %v1015
        %v1067 = vadd.f32 %v977, %v1017
        %v1068 = vadd.f32 %v978, %v1019
        %v1069 = vadd.f32 %v979, %v1021
        %v1070 = vadd.f32 %v980, %v1023
        %v1071 = vadd.f32 %v981, %v1025
        %v1072 = vadd.f32 %v982, %v1027
        %v1073 = vadd.f32 %v983, %v1029
        %v1074 = vadd.f32 %v984, %v1031
        %v1075 = vadd.f32 %v985, %v1033
        %v1076 = vadd.f32 %v986, %v1035
        %v1077 = vadd.f32 %v987, %v1037
        %v1078 = vadd.f32 %v988, %v1039
        %v1079 = vadd.f32 %v989, %v1041
        %v1080 = vadd.f32 %v990, %v1043
        %v1081 = vadd.f32 %v991, %v1045
        %v1082 = vadd.f32 %v992, %v1047
        %v1083 = vadd.f32 %v993, %v1049
        %v1084 = vadd.f32 %v994, %v1051
        %v1085 = vadd.f32 %v995, %v1053
        %v1086 = vadd.f32 %v996, %v1055
        %v1087 = vadd.f32 %v997, %v1057
        %v1088 = vmul.f32 %v1058, 2e-05
        %v1089 = vmul.f32 %v1059, 2e-05
        %v1090 = vmul.f32 %v1060, 2e-05
        %v1091 = vmul.f32 %v1061, 2e-05
        %v1092 = vmul.f32 %v1062, 2e-05
        %v1093 = vmul.f32 %v1063, 2e-05
        %v1094 = vmul.f32 %v1064, 2e-05
        %v1095 = vmul.f32 %v1065, 2e-05
        %v1096 = vmul.f32 %v1066, 2e-05
        %v1097 = vmul.f32 %v1067, 2e-05
        %v1098 = vmul.f32 %v1068, 2e-05
        %v1099 = vmul.f32 %v1069, 2e-05
        %v1100 = vmul.f32 %v1070, 2e-05
        %v1101 = vmul.f32 %v1071, 2e-05
        %v1102 = vmul.f32 %v1072, 2e-05
        %v1103 = vmul.f32 %v1073, 2e-05
        %v1104 = vmul.f32 %v1074, 2e-05
        %v1105 = vmul.f32 %v1075, 2e-05
        %v1106 = vmul.f32 %v1076, 2e-05
        %v1107 = vmul.f32 %v1077, 2e-05
        %v1108 = vmul.f32 %v1078, 2e-05
        %v1109 = vmul.f32 %v1079, 2e-05
        %v1110 = vmul.f32 %v1080, 2e-05
        %v1111 = vmul.f32 %v1081, 2e-05
        %v1112 = vmul.f32 %v1082, 2e-05
        %v1113 = vmul.f32 %v1083, 2e-05
        %v1114 = vmul.f32 %v1084, 2e-05
        %v1115 = vmul.f32 %v1085, 2e-05
        %v1116 = vmul.f32 %v1086, 2e-05
        %v1117 = vmul.f32 %v1087, 2e-05
        %v1118 = vadd.f32 %v1088, 2.0
        %v1119 = vadd.f32 %v1089, 2.0
        %v1120 = vadd.f32 %v1090, 2.0
        %v1121 = vadd.f32 %v1091, 2.0
        %v1122 = vadd.f32 %v1092, 2.0
        %v1123 = vadd.f32 %v1093, 2.0
        %v1124 = vadd.f32 %v1094, 2.0
        %v1125 = vadd.f32 %v1095, 2.0
        %v1126 = vadd.f32 %v1096, 2.0
        %v1127 = vadd.f32 %v1097, 2.0
        %v1128 = vadd.f32 %v1098, 2.0
        %v1129 = vadd.f32 %v1099, 2.0
        %v1130 = vadd.f32 %v1100, 2.0
        %v1131 = vadd.f32 %v1101, 2.0
        %v1132 = vadd.f32 %v1102, 2.0
        %v1133 = vadd.f32 %v1103, 2.0
        %v1134 = vadd.f32 %v1104, 2.0
        %v1135 = vadd.f32 %v1105, 2.0
        %v1136 = vadd.f32 %v1106, 2.0
        %v1137 = vadd.f32 %v1107, 2.0
        %v1138 = vadd.f32 %v1108, 2.0
        %v1139 = vadd.f32 %v1109, 2.0
        %v1140 = vadd.f32 %v1110, 2.0
        %v1141 = vadd.f32 %v1111, 2.0
        %v1142 = vadd.f32 %v1112, 2.0
        %v1143 = vadd.f32 %v1113, 2.0
        %v1144 = vadd.f32 %v1114, 2.0
        %v1145 = vadd.f32 %v1115, 2.0
        %v1146 = vadd.f32 %v1116, 2.0
        %v1147 = vadd.f32 %v1117, 2.0
        %v1148 = vrsqrt.pop %v1118
        %v1149 = vmul.f32 %v1118, %v1148
        %vm1150 = vcmp.eq.f32.partialorder %v1118, inf
        %v1151 = vsel %vm1150, %v1118, %v1149
        %vm1152 = vcmp.eq.f32.partialorder %v1118, 0.0
        %v1153 = vand.u32 %v1118, 2147483648
        %v1154 = vsel %vm1152, %v1153, %v1151
        %v1155 = vrsqrt.pop %v1119
        %v1156 = vmul.f32 %v1119, %v1155
        %vm1157 = vcmp.eq.f32.partialorder %v1119, inf
        %v1158 = vsel %vm1157, %v1119, %v1156
        %vm1159 = vcmp.eq.f32.partialorder %v1119, 0.0
        %v1160 = vand.u32 %v1119, 2147483648
        %v1161 = vsel %vm1159, %v1160, %v1158
        %v1162 = vrsqrt.pop %v1120
        %v1163 = vmul.f32 %v1120, %v1162
        %vm1164 = vcmp.eq.f32.partialorder %v1120, inf
        %v1165 = vsel %vm1164, %v1120, %v1163
        %vm1166 = vcmp.eq.f32.partialorder %v1120, 0.0
        %v1167 = vand.u32 %v1120, 2147483648
        %v1168 = vsel %vm1166, %v1167, %v1165
        %v1169 = vrsqrt.pop %v1121
        %v1170 = vmul.f32 %v1121, %v1169
        %vm1171 = vcmp.eq.f32.partialorder %v1121, inf
        %v1172 = vsel %vm1171, %v1121, %v1170
        %vm1173 = vcmp.eq.f32.partialorder %v1121, 0.0
        %v1174 = vand.u32 %v1121, 2147483648
        %v1175 = vsel %vm1173, %v1174, %v1172
        %v1176 = vrsqrt.pop %v1122
        %v1177 = vmul.f32 %v1122, %v1176
        %vm1178 = vcmp.eq.f32.partialorder %v1122, inf
        %v1179 = vsel %vm1178, %v1122, %v1177
        %vm1180 = vcmp.eq.f32.partialorder %v1122, 0.0
        %v1181 = vand.u32 %v1122, 2147483648
        %v1182 = vsel %vm1180, %v1181, %v1179
        %v1183 = vrsqrt.pop %v1123
        %v1184 = vmul.f32 %v1123, %v1183
        %vm1185 = vcmp.eq.f32.partialorder %v1123, inf
        %v1186 = vsel %vm1185, %v1123, %v1184
        %vm1187 = vcmp.eq.f32.partialorder %v1123, 0.0
        %v1188 = vand.u32 %v1123, 2147483648
        %v1189 = vsel %vm1187, %v1188, %v1186
        %v1190 = vrsqrt.pop %v1124
        %v1191 = vmul.f32 %v1124, %v1190
        %vm1192 = vcmp.eq.f32.partialorder %v1124, inf
        %v1193 = vsel %vm1192, %v1124, %v1191
        %vm1194 = vcmp.eq.f32.partialorder %v1124, 0.0
        %v1195 = vand.u32 %v1124, 2147483648
        %v1196 = vsel %vm1194, %v1195, %v1193
        %v1197 = vrsqrt.pop %v1125
        %v1198 = vmul.f32 %v1125, %v1197
        %vm1199 = vcmp.eq.f32.partialorder %v1125, inf
        %v1200 = vsel %vm1199, %v1125, %v1198
        %vm1201 = vcmp.eq.f32.partialorder %v1125, 0.0
        %v1202 = vand.u32 %v1125, 2147483648
        %v1203 = vsel %vm1201, %v1202, %v1200
        %v1204 = vrsqrt.pop %v1126
        %v1205 = vmul.f32 %v1126, %v1204
        %vm1206 = vcmp.eq.f32.partialorder %v1126, inf
        %v1207 = vsel %vm1206, %v1126, %v1205
        %vm1208 = vcmp.eq.f32.partialorder %v1126, 0.0
        %v1209 = vand.u32 %v1126, 2147483648
        %v1210 = vsel %vm1208, %v1209, %v1207
        %v1211 = vrsqrt.pop %v1127
        %v1212 = vmul.f32 %v1127, %v1211
        %vm1213 = vcmp.eq.f32.partialorder %v1127, inf
        %v1214 = vsel %vm1213, %v1127, %v1212
        %vm1215 = vcmp.eq.f32.partialorder %v1127, 0.0
        %v1216 = vand.u32 %v1127, 2147483648
        %v1217 = vsel %vm1215, %v1216, %v1214
        %v1218 = vrsqrt.pop %v1128
        %v1219 = vmul.f32 %v1128, %v1218
        %vm1220 = vcmp.eq.f32.partialorder %v1128, inf
        %v1221 = vsel %vm1220, %v1128, %v1219
        %vm1222 = vcmp.eq.f32.partialorder %v1128, 0.0
        %v1223 = vand.u32 %v1128, 2147483648
        %v1224 = vsel %vm1222, %v1223, %v1221
        %v1225 = vrsqrt.pop %v1129
        %v1226 = vmul.f32 %v1129, %v1225
        %vm1227 = vcmp.eq.f32.partialorder %v1129, inf
        %v1228 = vsel %vm1227, %v1129, %v1226
        %vm1229 = vcmp.eq.f32.partialorder %v1129, 0.0
        %v1230 = vand.u32 %v1129, 2147483648
        %v1231 = vsel %vm1229, %v1230, %v1228
        %v1232 = vrsqrt.pop %v1130
        %v1233 = vmul.f32 %v1130, %v1232
        %vm1234 = vcmp.eq.f32.partialorder %v1130, inf
        %v1235 = vsel %vm1234, %v1130, %v1233
        %vm1236 = vcmp.eq.f32.partialorder %v1130, 0.0
        %v1237 = vand.u32 %v1130, 2147483648
        %v1238 = vsel %vm1236, %v1237, %v1235
        %v1239 = vrsqrt.pop %v1131
        %v1240 = vmul.f32 %v1131, %v1239
        %vm1241 = vcmp.eq.f32.partialorder %v1131, inf
        %v1242 = vsel %vm1241, %v1131, %v1240
        %vm1243 = vcmp.eq.f32.partialorder %v1131, 0.0
        %v1244 = vand.u32 %v1131, 2147483648
        %v1245 = vsel %vm1243, %v1244, %v1242
        %v1246 = vrsqrt.pop %v1132
        %v1247 = vmul.f32 %v1132, %v1246
        %vm1248 = vcmp.eq.f32.partialorder %v1132, inf
        %v1249 = vsel %vm1248, %v1132, %v1247
        %vm1250 = vcmp.eq.f32.partialorder %v1132, 0.0
        %v1251 = vand.u32 %v1132, 2147483648
        %v1252 = vsel %vm1250, %v1251, %v1249
        %v1253 = vrsqrt.pop %v1133
        %v1254 = vmul.f32 %v1133, %v1253
        %vm1255 = vcmp.eq.f32.partialorder %v1133, inf
        %v1256 = vsel %vm1255, %v1133, %v1254
        %vm1257 = vcmp.eq.f32.partialorder %v1133, 0.0
        %v1258 = vand.u32 %v1133, 2147483648
        %v1259 = vsel %vm1257, %v1258, %v1256
        %v1260 = vrsqrt.pop %v1134
        %v1261 = vmul.f32 %v1134, %v1260
        %vm1262 = vcmp.eq.f32.partialorder %v1134, inf
        %v1263 = vsel %vm1262, %v1134, %v1261
        %vm1264 = vcmp.eq.f32.partialorder %v1134, 0.0
        %v1265 = vand.u32 %v1134, 2147483648
        %v1266 = vsel %vm1264, %v1265, %v1263
        %v1267 = vrsqrt.pop %v1135
        %v1268 = vmul.f32 %v1135, %v1267
        %vm1269 = vcmp.eq.f32.partialorder %v1135, inf
        %v1270 = vsel %vm1269, %v1135, %v1268
        %vm1271 = vcmp.eq.f32.partialorder %v1135, 0.0
        %v1272 = vand.u32 %v1135, 2147483648
        %v1273 = vsel %vm1271, %v1272, %v1270
        %v1274 = vrsqrt.pop %v1136
        %v1275 = vmul.f32 %v1136, %v1274
        %vm1276 = vcmp.eq.f32.partialorder %v1136, inf
        %v1277 = vsel %vm1276, %v1136, %v1275
        %vm1278 = vcmp.eq.f32.partialorder %v1136, 0.0
        %v1279 = vand.u32 %v1136, 2147483648
        %v1280 = vsel %vm1278, %v1279, %v1277
        %v1281 = vrsqrt.pop %v1137
        %v1282 = vmul.f32 %v1137, %v1281
        %vm1283 = vcmp.eq.f32.partialorder %v1137, inf
        %v1284 = vsel %vm1283, %v1137, %v1282
        %vm1285 = vcmp.eq.f32.partialorder %v1137, 0.0
        %v1286 = vand.u32 %v1137, 2147483648
        %v1287 = vsel %vm1285, %v1286, %v1284
        %v1288 = vrsqrt.pop %v1138
        %v1289 = vmul.f32 %v1138, %v1288
        %vm1290 = vcmp.eq.f32.partialorder %v1138, inf
        %v1291 = vsel %vm1290, %v1138, %v1289
        %vm1292 = vcmp.eq.f32.partialorder %v1138, 0.0
        %v1293 = vand.u32 %v1138, 2147483648
        %v1294 = vsel %vm1292, %v1293, %v1291
        %v1295 = vrsqrt.pop %v1139
        %v1296 = vmul.f32 %v1139, %v1295
        %vm1297 = vcmp.eq.f32.partialorder %v1139, inf
        %v1298 = vsel %vm1297, %v1139, %v1296
        %vm1299 = vcmp.eq.f32.partialorder %v1139, 0.0
        %v1300 = vand.u32 %v1139, 2147483648
        %v1301 = vsel %vm1299, %v1300, %v1298
        %v1302 = vrsqrt.pop %v1140
        %v1303 = vmul.f32 %v1140, %v1302
        %vm1304 = vcmp.eq.f32.partialorder %v1140, inf
        %v1305 = vsel %vm1304, %v1140, %v1303
        %vm1306 = vcmp.eq.f32.partialorder %v1140, 0.0
        %v1307 = vand.u32 %v1140, 2147483648
        %v1308 = vsel %vm1306, %v1307, %v1305
        %v1309 = vrsqrt.pop %v1141
        %v1310 = vmul.f32 %v1141, %v1309
        %vm1311 = vcmp.eq.f32.partialorder %v1141, inf
        %v1312 = vsel %vm1311, %v1141, %v1310
        %vm1313 = vcmp.eq.f32.partialorder %v1141, 0.0
        %v1314 = vand.u32 %v1141, 2147483648
        %v1315 = vsel %vm1313, %v1314, %v1312
        %v1316 = vrsqrt.pop %v1142
        %v1317 = vmul.f32 %v1142, %v1316
        %vm1318 = vcmp.eq.f32.partialorder %v1142, inf
        %v1319 = vsel %vm1318, %v1142, %v1317
        %vm1320 = vcmp.eq.f32.partialorder %v1142, 0.0
        %v1321 = vand.u32 %v1142, 2147483648
        %v1322 = vsel %vm1320, %v1321, %v1319
        %v1323 = vrsqrt.pop %v1143
        %v1324 = vmul.f32 %v1143, %v1323
        %vm1325 = vcmp.eq.f32.partialorder %v1143, inf
        %v1326 = vsel %vm1325, %v1143, %v1324
        %vm1327 = vcmp.eq.f32.partialorder %v1143, 0.0
        %v1328 = vand.u32 %v1143, 2147483648
        %v1329 = vsel %vm1327, %v1328, %v1326
        %v1330 = vrsqrt.pop %v1144
        %v1331 = vmul.f32 %v1144, %v1330
        %vm1332 = vcmp.eq.f32.partialorder %v1144, inf
        %v1333 = vsel %vm1332, %v1144, %v1331
        %vm1334 = vcmp.eq.f32.partialorder %v1144, 0.0
        %v1335 = vand.u32 %v1144, 2147483648
        %v1336 = vsel %vm1334, %v1335, %v1333
        %v1337 = vrsqrt.pop %v1145
        %v1338 = vmul.f32 %v1145, %v1337
        %vm1339 = vcmp.eq.f32.partialorder %v1145, inf
        %v1340 = vsel %vm1339, %v1145, %v1338
        %vm1341 = vcmp.eq.f32.partialorder %v1145, 0.0
        %v1342 = vand.u32 %v1145, 2147483648
        %v1343 = vsel %vm1341, %v1342, %v1340
        %v1344 = vrsqrt.pop %v1146
        %v1345 = vmul.f32 %v1146, %v1344
        %vm1346 = vcmp.eq.f32.partialorder %v1146, inf
        %v1347 = vsel %vm1346, %v1146, %v1345
        %vm1348 = vcmp.eq.f32.partialorder %v1146, 0.0
        %v1349 = vand.u32 %v1146, 2147483648
        %v1350 = vsel %vm1348, %v1349, %v1347
        %v1351 = vrsqrt.pop %v1147
        %v1352 = vmul.f32 %v1147, %v1351
        %vm1353 = vcmp.eq.f32.partialorder %v1147, inf
        %v1354 = vsel %vm1353, %v1147, %v1352
        %vm1355 = vcmp.eq.f32.partialorder %v1147, 0.0
        %v1356 = vand.u32 %v1147, 2147483648
        %v1357 = vsel %vm1355, %v1356, %v1354
        %v1358 = vmul.f32 %v1118, %v1154
        %v1359 = vmul.f32 %v1119, %v1161
        %v1360 = vmul.f32 %v1120, %v1168
        %v1361 = vmul.f32 %v1121, %v1175
        %v1362 = vmul.f32 %v1122, %v1182
        %v1363 = vmul.f32 %v1123, %v1189
        %v1364 = vmul.f32 %v1124, %v1196
        %v1365 = vmul.f32 %v1125, %v1203
        %v1366 = vmul.f32 %v1126, %v1210
        %v1367 = vmul.f32 %v1127, %v1217
        %v1368 = vmul.f32 %v1128, %v1224
        %v1369 = vmul.f32 %v1129, %v1231
        %v1370 = vmul.f32 %v1130, %v1238
        %v1371 = vmul.f32 %v1131, %v1245
        %v1372 = vmul.f32 %v1132, %v1252
        %v1373 = vmul.f32 %v1133, %v1259
        %v1374 = vmul.f32 %v1134, %v1266
        %v1375 = vmul.f32 %v1135, %v1273
        %v1376 = vmul.f32 %v1136, %v1280
        %v1377 = vmul.f32 %v1137, %v1287
        %v1378 = vmul.f32 %v1138, %v1294
        %v1379 = vmul.f32 %v1139, %v1301
        %v1380 = vmul.f32 %v1140, %v1308
        %v1381 = vmul.f32 %v1141, %v1315
        %v1382 = vmul.f32 %v1142, %v1322
        %v1383 = vmul.f32 %v1143, %v1329
        %v1384 = vmul.f32 %v1144, %v1336
        %v1385 = vmul.f32 %v1145, %v1343
        %v1386 = vmul.f32 %v1146, %v1350
        %v1387 = vmul.f32 %v1147, %v1357
        %v1388 = vrsqrt.pop %v1358
        %v1389 = vrsqrt.pop %v1359
        %v1390 = vrsqrt.pop %v1360
        %v1391 = vrsqrt.pop %v1361
        %v1392 = vrsqrt.pop %v1362
        %v1393 = vrsqrt.pop %v1363
        %v1394 = vrsqrt.pop %v1364
        %v1395 = vrsqrt.pop %v1365
        %v1396 = vrsqrt.pop %v1366
        %v1397 = vrsqrt.pop %v1367
        %v1398 = vrsqrt.pop %v1368
        %v1399 = vrsqrt.pop %v1369
        %v1400 = vrsqrt.pop %v1370
        %v1401 = vrsqrt.pop %v1371
        %v1402 = vrsqrt.pop %v1372
        %v1403 = vrsqrt.pop %v1373
        %v1404 = vrsqrt.pop %v1374
        %v1405 = vrsqrt.pop %v1375
        %v1406 = vrsqrt.pop %v1376
        %v1407 = vrsqrt.pop %v1377
        %v1408 = vrsqrt.pop %v1378
        %v1409 = vrsqrt.pop %v1379
        %v1410 = vrsqrt.pop %v1380
        %v1411 = vrsqrt.pop %v1381
        %v1412 = vrsqrt.pop %v1382
        %v1413 = vrsqrt.pop %v1383
        %v1414 = vrsqrt.pop %v1384
        %v1415 = vrsqrt.pop %v1385
        %v1416 = vrsqrt.pop %v1386
        %v1417 = vrsqrt.pop %v1387
        %v1418 = vmul.f32 %v668, %v1388
        %v1419 = vmul.f32 %v669, %v1389
        %v1420 = vmul.f32 %v670, %v1390
        %v1421 = vmul.f32 %v671, %v1391
        %v1422 = vmul.f32 %v672, %v1392
        %v1423 = vmul.f32 %v673, %v1393
        %v1424 = vmul.f32 %v674, %v1394
        %v1425 = vmul.f32 %v675, %v1395
        %v1426 = vmul.f32 %v676, %v1396
        %v1427 = vmul.f32 %v677, %v1397
        %v1428 = vmul.f32 %v678, %v1398
        %v1429 = vmul.f32 %v679, %v1399
        %v1430 = vmul.f32 %v680, %v1400
        %v1431 = vmul.f32 %v681, %v1401
        %v1432 = vmul.f32 %v682, %v1402
        %v1433 = vmul.f32 %v683, %v1403
        %v1434 = vmul.f32 %v684, %v1404
        %v1435 = vmul.f32 %v685, %v1405
        %v1436 = vmul.f32 %v686, %v1406
        %v1437 = vmul.f32 %v687, %v1407
        %v1438 = vmul.f32 %v688, %v1408
        %v1439 = vmul.f32 %v689, %v1409
        %v1440 = vmul.f32 %v690, %v1410
        %v1441 = vmul.f32 %v691, %v1411
        %v1442 = vmul.f32 %v692, %v1412
        %v1443 = vmul.f32 %v693, %v1413
        %v1444 = vmul.f32 %v694, %v1414
        %v1445 = vmul.f32 %v695, %v1415
        %v1446 = vmul.f32 %v696, %v1416
        %v1447 = vmul.f32 %v697, %v1417
        %v1448 = vmax.f32 %v1418, %v1420
        %v1449 = vmax.f32 %v1419, %v1421
        %v1450 = vmax.f32 %v1422, %v1424
        %v1451 = vmax.f32 %v1423, %v1425
        %v1452 = vmax.f32 %v1426, %v1428
        %v1453 = vmax.f32 %v1427, %v1429
        %v1454 = vmax.f32 %v1430, %v1432
        %v1455 = vmax.f32 %v1431, %v1433
        %v1456 = vmax.f32 %v1434, %v1436
        %v1457 = vmax.f32 %v1435, %v1437
        %v1458 = vmax.f32 %v1438, %v1440
        %v1459 = vmax.f32 %v1439, %v1441
        %v1460 = vmax.f32 %v1442, %v1444
        %v1461 = vmax.f32 %v1443, %v1445
        %v1462 = vmax.f32 %v1448, %v1422
        %v1463 = vmax.f32 %v1449, %v1423
        %v1464 = vmax.f32 %v1450, %v1426
        %v1465 = vmax.f32 %v1451, %v1427
        %v1466 = vmax.f32 %v1452, %v1430
        %v1467 = vmax.f32 %v1453, %v1431
        %v1468 = vmax.f32 %v1454, %v1434
        %v1469 = vmax.f32 %v1455, %v1435
        %v1470 = vmax.f32 %v1456, %v1438
        %v1471 = vmax.f32 %v1457, %v1439
        %v1472 = vmax.f32 %v1458, %v1442
        %v1473 = vmax.f32 %v1459, %v1443
        %v1474 = vmax.f32 %v1460, %v1446
        %v1475 = vmax.f32 %v1461, %v1447
        %v1483 = vrot.slane %v1462, 1
        %v1484 = vrot.slane %v1464, 1
        %v1485 = vrot.slane %v1466, 1
        %v1486 = vrot.slane %v1468, 1
        %v1487 = vrot.slane %v1470, 1
        %v1488 = vrot.slane %v1472, 1
        %v1489 = vrot.slane %v1474, 1
        %v1497 = vmax.f32 %v1462, %v1483
        %v1498 = vmax.f32 %v1464, %v1484
        %v1499 = vmax.f32 %v1466, %v1485
        %v1500 = vmax.f32 %v1468, %v1486
        %v1501 = vmax.f32 %v1470, %v1487
        %v1502 = vmax.f32 %v1472, %v1488
        %v1503 = vmax.f32 %v1474, %v1489
        %v1504 = vrot.slane %v1462, 2
        %v1505 = vrot.slane %v1464, 2
        %v1506 = vrot.slane %v1466, 2
        %v1507 = vrot.slane %v1468, 2
        %v1508 = vrot.slane %v1470, 2
        %v1509 = vrot.slane %v1472, 2
        %v1510 = vrot.slane %v1474, 2
        %v1518 = vmax.f32 %v1497, %v1504
        %v1519 = vmax.f32 %v1498, %v1505
        %v1520 = vmax.f32 %v1499, %v1506
        %v1521 = vmax.f32 %v1500, %v1507
        %v1522 = vmax.f32 %v1501, %v1508
        %v1523 = vmax.f32 %v1502, %v1509
        %v1524 = vmax.f32 %v1503, %v1510
        %v1532 = vrot.slane %v1463, 2
        %v1533 = vrot.slane %v1465, 2
        %v1534 = vrot.slane %v1467, 2
        %v1535 = vrot.slane %v1469, 2
        %v1536 = vrot.slane %v1471, 2
        %v1537 = vrot.slane %v1473, 2
        %v1538 = vrot.slane %v1475, 2
        %v1546 = vmax.f32 %v1497, %v1532
        %v1547 = vmax.f32 %v1498, %v1533
        %v1548 = vmax.f32 %v1499, %v1534
        %v1549 = vmax.f32 %v1500, %v1535
        %v1550 = vmax.f32 %v1501, %v1536
        %v1551 = vmax.f32 %v1502, %v1537
        %v1552 = vmax.f32 %v1503, %v1538
        %v1553 = vrot.slane %v1463, 1
        %v1554 = vrot.slane %v1465, 1
        %v1555 = vrot.slane %v1467, 1
        %v1556 = vrot.slane %v1469, 1
        %v1557 = vrot.slane %v1471, 1
        %v1558 = vrot.slane %v1473, 1
        %v1559 = vrot.slane %v1475, 1
        %v1567 = vmax.f32 %v1463, %v1553
        %v1568 = vmax.f32 %v1465, %v1554
        %v1569 = vmax.f32 %v1467, %v1555
        %v1570 = vmax.f32 %v1469, %v1556
        %v1571 = vmax.f32 %v1471, %v1557
        %v1572 = vmax.f32 %v1473, %v1558
        %v1573 = vmax.f32 %v1475, %v1559
        %v1574 = vmax.f32 %v1567, %v1532
        %v1575 = vmax.f32 %v1568, %v1533
        %v1576 = vmax.f32 %v1569, %v1534
        %v1577 = vmax.f32 %v1570, %v1535
        %v1578 = vmax.f32 %v1571, %v1536
        %v1579 = vmax.f32 %v1572, %v1537
        %v1580 = vmax.f32 %v1573, %v1538
        %v1588 = vrot.slane %v1518, 2
        %v1589 = vrot.slane %v1519, 2
        %v1590 = vrot.slane %v1520, 2
        %v1591 = vrot.slane %v1521, 2
        %v1592 = vrot.slane %v1522, 2
        %v1593 = vrot.slane %v1523, 2
        %v1594 = vrot.slane %v1524, 2
        %1595 = vrot.lane.b32.xlu0 %v1588, 16
        %v1596 = vpop.permute.xlu0 %1595
        %1597 = vrot.lane.b32.xlu0 %v1589, 16
        %v1598 = vpop.permute.xlu0 %1597
        %1599 = vrot.lane.b32.xlu0 %v1590, 16
        %v1600 = vpop.permute.xlu0 %1599
        %1601 = vrot.lane.b32.xlu0 %v1591, 16
        %v1602 = vpop.permute.xlu0 %1601
        %1603 = vrot.lane.b32.xlu0 %v1592, 16
        %v1604 = vpop.permute.xlu0 %1603
        %1605 = vrot.lane.b32.xlu0 %v1593, 16
        %v1606 = vpop.permute.xlu0 %1605
        %1607 = vrot.lane.b32.xlu0 %v1594, 16
        %v1608 = vpop.permute.xlu0 %1607
        %v1616 = vrot.slane %v1518, 4
        %v1617 = vrot.slane %v1519, 4
        %v1618 = vrot.slane %v1520, 4
        %v1619 = vrot.slane %v1521, 4
        %v1620 = vrot.slane %v1522, 4
        %v1621 = vrot.slane %v1523, 4
        %v1622 = vrot.slane %v1524, 4
        %1623 = vrot.lane.b32.xlu0 %v1616, 32
        %v1624 = vpop.permute.xlu0 %1623
        %1625 = vrot.lane.b32.xlu0 %v1617, 32
        %v1626 = vpop.permute.xlu0 %1625
        %1627 = vrot.lane.b32.xlu0 %v1618, 32
        %v1628 = vpop.permute.xlu0 %1627
        %1629 = vrot.lane.b32.xlu0 %v1619, 32
        %v1630 = vpop.permute.xlu0 %1629
        %1631 = vrot.lane.b32.xlu0 %v1620, 32
        %v1632 = vpop.permute.xlu0 %1631
        %1633 = vrot.lane.b32.xlu0 %v1621, 32
        %v1634 = vpop.permute.xlu0 %1633
        %1635 = vrot.lane.b32.xlu0 %v1622, 32
        %v1636 = vpop.permute.xlu0 %1635
        %v1651 = vrot.slane %v1546, 6
        %v1652 = vrot.slane %v1547, 6
        %v1653 = vrot.slane %v1548, 6
        %v1654 = vrot.slane %v1549, 6
        %v1655 = vrot.slane %v1550, 6
        %v1656 = vrot.slane %v1551, 6
        %v1657 = vrot.slane %v1552, 6
        %1658 = vrot.lane.b32.xlu0 %v1651, 48
        %v1659 = vpop.permute.xlu0 %1658
        %1660 = vrot.lane.b32.xlu0 %v1652, 48
        %v1661 = vpop.permute.xlu0 %1660
        %1662 = vrot.lane.b32.xlu0 %v1653, 48
        %v1663 = vpop.permute.xlu0 %1662
        %1664 = vrot.lane.b32.xlu0 %v1654, 48
        %v1665 = vpop.permute.xlu0 %1664
        %1666 = vrot.lane.b32.xlu0 %v1655, 48
        %v1667 = vpop.permute.xlu0 %1666
        %1668 = vrot.lane.b32.xlu0 %v1656, 48
        %v1669 = vpop.permute.xlu0 %1668
        %1670 = vrot.lane.b32.xlu0 %v1657, 48
        %v1671 = vpop.permute.xlu0 %1670
        %1686 = vrot.lane.b32.xlu0 %v1574, 64
        %v1687 = vpop.permute.xlu0 %1686
        %1688 = vrot.lane.b32.xlu0 %v1575, 64
        %v1689 = vpop.permute.xlu0 %1688
        %1690 = vrot.lane.b32.xlu0 %v1576, 64
        %v1691 = vpop.permute.xlu0 %1690
        %1692 = vrot.lane.b32.xlu0 %v1577, 64
        %v1693 = vpop.permute.xlu0 %1692
        %1694 = vrot.lane.b32.xlu0 %v1578, 64
        %v1695 = vpop.permute.xlu0 %1694
        %1696 = vrot.lane.b32.xlu0 %v1579, 64
        %v1697 = vpop.permute.xlu0 %1696
        %1698 = vrot.lane.b32.xlu0 %v1580, 64
        %v1699 = vpop.permute.xlu0 %1698
        %v1707 = vrot.slane %v1574, 2
        %v1708 = vrot.slane %v1575, 2
        %v1709 = vrot.slane %v1576, 2
        %v1710 = vrot.slane %v1577, 2
        %v1711 = vrot.slane %v1578, 2
        %v1712 = vrot.slane %v1579, 2
        %v1713 = vrot.slane %v1580, 2
        %1714 = vrot.lane.b32.xlu0 %v1707, 80
        %v1715 = vpop.permute.xlu0 %1714
        %1716 = vrot.lane.b32.xlu0 %v1708, 80
        %v1717 = vpop.permute.xlu0 %1716
        %1718 = vrot.lane.b32.xlu0 %v1709, 80
        %v1719 = vpop.permute.xlu0 %1718
        %1720 = vrot.lane.b32.xlu0 %v1710, 80
        %v1721 = vpop.permute.xlu0 %1720
        %1722 = vrot.lane.b32.xlu0 %v1711, 80
        %v1723 = vpop.permute.xlu0 %1722
        %1724 = vrot.lane.b32.xlu0 %v1712, 80
        %v1725 = vpop.permute.xlu0 %1724
        %1726 = vrot.lane.b32.xlu0 %v1713, 80
        %v1727 = vpop.permute.xlu0 %1726
        %v1735 = vrot.slane %v1574, 4
        %v1736 = vrot.slane %v1575, 4
        %v1737 = vrot.slane %v1576, 4
        %v1738 = vrot.slane %v1577, 4
        %v1739 = vrot.slane %v1578, 4
        %v1740 = vrot.slane %v1579, 4
        %v1741 = vrot.slane %v1580, 4
        %1742 = vrot.lane.b32.xlu0 %v1735, 96
        %v1743 = vpop.permute.xlu0 %1742
        %1744 = vrot.lane.b32.xlu0 %v1736, 96
        %v1745 = vpop.permute.xlu0 %1744
        %1746 = vrot.lane.b32.xlu0 %v1737, 96
        %v1747 = vpop.permute.xlu0 %1746
        %1748 = vrot.lane.b32.xlu0 %v1738, 96
        %v1749 = vpop.permute.xlu0 %1748
        %1750 = vrot.lane.b32.xlu0 %v1739, 96
        %v1751 = vpop.permute.xlu0 %1750
        %1752 = vrot.lane.b32.xlu0 %v1740, 96
        %v1753 = vpop.permute.xlu0 %1752
        %1754 = vrot.lane.b32.xlu0 %v1741, 96
        %v1755 = vpop.permute.xlu0 %1754
        %vm1763 = vcmask 130048
        %v1764 = vsel %vm1763, %v1518, %v1596
        %v1765 = vsel %vm1763, %v1519, %v1598
        %v1766 = vsel %vm1763, %v1520, %v1600
        %v1767 = vsel %vm1763, %v1521, %v1602
        %v1768 = vsel %vm1763, %v1522, %v1604
        %v1769 = vsel %vm1763, %v1523, %v1606
        %v1770 = vsel %vm1763, %v1524, %v1608
        %vm1771 = vcmask 261120
        %v1772 = vsel %vm1771, %v1764, %v1624
        %v1773 = vsel %vm1771, %v1765, %v1626
        %v1774 = vsel %vm1771, %v1766, %v1628
        %v1775 = vsel %vm1771, %v1767, %v1630
        %v1776 = vsel %vm1771, %v1768, %v1632
        %v1777 = vsel %vm1771, %v1769, %v1634
        %v1778 = vsel %vm1771, %v1770, %v1636
        %vm1779 = vcmask 392192
        %v1780 = vsel %vm1779, %v1772, %v1659
        %v1781 = vsel %vm1779, %v1773, %v1661
        %v1782 = vsel %vm1779, %v1774, %v1663
        %v1783 = vsel %vm1779, %v1775, %v1665
        %v1784 = vsel %vm1779, %v1776, %v1667
        %v1785 = vsel %vm1779, %v1777, %v1669
        %v1786 = vsel %vm1779, %v1778, %v1671
        %vm1787 = vcmask 523264
        %v1788 = vsel %vm1787, %v1780, %v1687
        %v1789 = vsel %vm1787, %v1781, %v1689
        %v1790 = vsel %vm1787, %v1782, %v1691
        %v1791 = vsel %vm1787, %v1783, %v1693
        %v1792 = vsel %vm1787, %v1784, %v1695
        %v1793 = vsel %vm1787, %v1785, %v1697
        %v1794 = vsel %vm1787, %v1786, %v1699
        %vm1795 = vcmask 654336
        %v1796 = vsel %vm1795, %v1788, %v1715
        %v1797 = vsel %vm1795, %v1789, %v1717
        %v1798 = vsel %vm1795, %v1790, %v1719
        %v1799 = vsel %vm1795, %v1791, %v1721
        %v1800 = vsel %vm1795, %v1792, %v1723
        %v1801 = vsel %vm1795, %v1793, %v1725
        %v1802 = vsel %vm1795, %v1794, %v1727
        %vm1803 = vcmask 785408
        %v1804 = vsel %vm1803, %v1796, %v1743
        %v1805 = vsel %vm1803, %v1797, %v1745
        %v1806 = vsel %vm1803, %v1798, %v1747
        %v1807 = vsel %vm1803, %v1799, %v1749
        %v1808 = vsel %vm1803, %v1800, %v1751
        %v1809 = vsel %vm1803, %v1801, %v1753
        %v1810 = vsel %vm1803, %v1802, %v1755
        %vm1811 = vcmask 909312
        %1812 = vst.msk [vmem:[%s306] sm:$0x1] %vm1811, %v1804
        %1813 = vst.msk [vmem:[%s306 + $0x1] sm:$0x1] %vm1811, %v1805
        %1814 = vst.msk [vmem:[%s306 + $0x2] sm:$0x1] %vm1811, %v1806
        %1815 = vst.msk [vmem:[%s306 + $0x3] sm:$0x1] %vm1811, %v1807
        %1816 = vst.msk [vmem:[%s306 + $0x4] sm:$0x1] %vm1811, %v1808
        %1817 = vst.msk [vmem:[%s306 + $0x5] sm:$0x1] %vm1811, %v1809
        %1818 = vst.msk [vmem:[%s306 + $0x6] sm:$0x1] %vm1811, %v1810
        %s1819 = sand.u32 %s148, 1
        %s1820 = scalar_lea.sflag [#allocation4], %s1819
        %s1821 = sand.u32 %s148, 1
        %s1822 = smul.addr %s1821, 7
        %s1823 = scalar_lea.vmem [#allocation8], %s1822
        // Predicated region
        $region49: #{tpu_custom_call.1} parent=35 // pred_check
          %p1824 = pneg %p158
        $region50: #{tpu_custom_call.1} parent=35 // pred_check_branch
          %1826 = sbr.rel (%p1824) target = $region52
        $region51: #{tpu_custom_call.1} parent=35 // pred_region
          %s1827 = smul.u32 7, %s29
          %s1829 = ssub.s32 112, 112
          %1830 = vsyncadd %s1820, %s1829
          %s1831 = smul.addr %s28, 7
          %s1832 = sadd.s32 %s1827, %s1831
          %s1833 = smul.addr %s1832, 16
          %s1834 = scalar_lea.hbm %s4, %s1833
          %s1835 = sshll.u32 %s1823, 4
          %s1836 = int_to_ptr.vmem [resolvable:$true] %s1835
          %1841 = dma.vmem_to_hbm [thread:$0]  %s1836, 112, %s1834, %s1820, 16, 16, 1
        $region52: #{tpu_custom_call.1} parent=35 // pred_fallthru
          _
      $region36: #{tpu_custom_call.1} parent=5 // pred_fallthru
        _
      %p1842 = scmp.le.s32.totalorder 2, %s19
      // Predicated region
      $region53: #{tpu_custom_call.1} parent=5 // pred_check
        %p1843 = pneg %p1842
      $region54: #{tpu_custom_call.1} parent=5 // pred_check_branch
        %1845 = sbr.rel (%p1843) target = $region56
      $region55: #{tpu_custom_call.1} parent=5 // pred_region
        %s1846 = ssub.s32 %s19, 2
        // Predicated region
        $region57: #{tpu_custom_call.1} parent=55 // pred_check
          %p1847 = pneg %p164
        $region58: #{tpu_custom_call.1} parent=55 // pred_check_branch
          %1849 = sbr.rel (%p1847) target = $region60
        $region59: #{tpu_custom_call.1} parent=55 // pred_region
          %s1850 = sand.u32 %s149, 1
          %s1851 = scalar_lea.sflag [#allocation4], %s1850
          %s1852 = sand.u32 %s149, 1
          %s1853 = smul.addr %s1852, 7
          %s1854 = scalar_lea.vmem [#allocation8], %s1853
          %1855 = dma.done %s1851, 112
        $region60: #{tpu_custom_call.1} parent=55 // pred_fallthru
          _
      $region56: #{tpu_custom_call.1} parent=5 // pred_fallthru
        _
    $region6: #{tpu_custom_call.1} parent=1 // loop_footer
      %s23 = sadd.s32 1, %s19
    $region7: #{tpu_custom_call.1} parent=1 // loop_footer_branch
      %18 = sbr.rel target = $region3
    $region8: #{tpu_custom_call.1} parent=1 // loop_exit
      _
    %1856 = vsyncpa [#allocation3], 1
    %s1857 = scalar_lea.sflag [#allocation3], 1
    %1858 = vsyncpa %s1857, 1
    %1859 = vsyncpa [#allocation6], 1
    %s1860 = scalar_lea.sflag [#allocation6], 1
    %1861 = vsyncpa %s1860, 1
    %1862 = vsyncpa [#allocation4], 1
    %s1863 = scalar_lea.sflag [#allocation4], 1
    %1864 = vsyncpa %s1863, 1

</llo_original>
